<compile_context>
chip_gen: v5e
topology: v5e:2x2
jax: 0.10.0
libtpu: 0.0.40
codegen_flags: <defaults>
</compile_context>

<pallas_src>
import math

import jax
import jax.numpy as jnp
from jax.experimental import pallas as pl
from jax.experimental.pallas import tpu as pltpu

# ----------------------------- config (small) --------------------------------
VOCAB = 50
VOCAB_PAD = 128          # lane-dense padded vocab for the output store
D_MODEL = 32
N_HEADS = 4
D_K = D_MODEL // N_HEADS
D_FF = 64
N_BLOCKS = 2
BATCH = 2
SEQ = 8
LN_EPS = 1e-5

# ---- packed weight slab layout: (N_WSLAB, 128, 128) bf16, one leading index per matrix
N_WSLAB = 1 + 4 * N_BLOCKS + 1
W_EMB = 0                                 # rows 0:VOCAB,   cols 0:D      (sqrt(D) folded)
W_QKV = lambda l: 1 + 4 * l               # rows 0:D,       cols 0:3D     (1/sqrt(dk) folded into q part)
W_O   = lambda l: 2 + 4 * l               # rows 0:D,       cols 0:D
W_FF1 = lambda l: 3 + 4 * l               # rows 0:D,       cols 0:D_FF
W_FF2 = lambda l: 4 + 4 * l               # rows 0:D_FF,    cols 0:D
W_OUT = N_WSLAB - 1                       # rows 0:D,       cols 0:VOCAB_PAD

# ---- packed bias / LayerNorm slab layout: (N_BROWS_PAD, 128) f32, one row per vector
R_BQKV = lambda l: 8 * l + 0
R_BO   = lambda l: 8 * l + 1
R_B1   = lambda l: 8 * l + 2
R_B2   = lambda l: 8 * l + 3
R_LN1G = lambda l: 8 * l + 4
R_LN1B = lambda l: 8 * l + 5
R_LN2G = lambda l: 8 * l + 6
R_LN2B = lambda l: 8 * l + 7
R_LNFG = 8 * N_BLOCKS + 0
R_LNFB = 8 * N_BLOCKS + 1
R_BOUT = 8 * N_BLOCKS + 2
N_BROWS = 8 * N_BLOCKS + 3
N_BROWS_PAD = ((N_BROWS + 7) // 8) * 8


# ----------------------------- fused Pallas kernel ----------------------------
def _fused_transformer_kernel(tok_ref, bias_ref, pe_ref, w_ref, b_ref, o_ref):
    bs = tok_ref.shape[0]                 # B*S (folded batch)
    d = D_MODEL
    dk = D_K

    # ---- embedding: one-hot (iota == token) matmul (sqrt(d) folded into the
    #      table), plus sinusoidal positional encoding (already tiled to B*S)
    tok = tok_ref[...]                                            # (BS, 1) int32
    lane = jax.lax.broadcasted_iota(jnp.int32, (bs, VOCAB_PAD), 1)
    one_hot = (lane == tok).astype(jnp.bfloat16)                  # (BS, 128)
    x = jnp.dot(one_hot, w_ref[W_EMB, :, :d],
                preferred_element_type=jnp.float32) + pe_ref[...]  # (BS, D) f32

    attn_bias = bias_ref[...]                                     # (BS, BS) f32

    def layer_norm(h, g_row, b_row):
        g = b_ref[g_row:g_row + 1, :d]
        bb = b_ref[b_row:b_row + 1, :d]
        s1 = jnp.sum(h, axis=-1, keepdims=True)
        s2 = jnp.sum(h * h, axis=-1, keepdims=True)
        mu = s1 * (1.0 / d)
        var = s2 * (1.0 / d) - mu * mu
        return (h - mu) * jax.lax.rsqrt(var + LN_EPS) * g + bb

    for l in range(N_BLOCKS):
        # --- multi-head self-attention sublayer (pre-norm + residual) ---
        h = layer_norm(x, R_LN1G(l), R_LN1B(l))
        qkv = jnp.dot(h.astype(jnp.bfloat16), w_ref[W_QKV(l), :d, :3 * d],
                      preferred_element_type=jnp.float32) + b_ref[R_BQKV(l):R_BQKV(l) + 1, :3 * d]
        heads = []
        for hd in range(N_HEADS):
            q = qkv[:, hd * dk:(hd + 1) * dk].astype(jnp.bfloat16)            # (BS, dk)
            k = qkv[:, d + hd * dk:d + (hd + 1) * dk].astype(jnp.bfloat16)    # (BS, dk)
            v = qkv[:, 2 * d + hd * dk:2 * d + (hd + 1) * dk].astype(jnp.bfloat16)
            # scores = q @ k^T without materializing the transpose
            s = jax.lax.dot_general(q, k, (((1,), (1,)), ((), ())),
                                    preferred_element_type=jnp.float32)       # (BS, BS)
            s = s + attn_bias                                                  # block-diag causal
            s = s - jnp.max(s, axis=-1, keepdims=True)
            p = jnp.exp(s)
            p = p * pl.reciprocal(jnp.sum(p, axis=-1, keepdims=True), approx=True)
            heads.append(jnp.dot(p.astype(jnp.bfloat16), v,
                                 preferred_element_type=jnp.float32))          # (BS, dk)
        ctx = jnp.concatenate(heads, axis=-1).astype(jnp.bfloat16)             # (BS, D)
        attn = jnp.dot(ctx, w_ref[W_O(l), :d, :d],
                       preferred_element_type=jnp.float32) + b_ref[R_BO(l):R_BO(l) + 1, :d]
        x = x + attn

        # --- position-wise feed-forward sublayer (pre-norm + residual) ---
        h = layer_norm(x, R_LN2G(l), R_LN2B(l))
        f = jnp.dot(h.astype(jnp.bfloat16), w_ref[W_FF1(l), :d, :D_FF],
                    preferred_element_type=jnp.float32) + b_ref[R_B1(l):R_B1(l) + 1, :D_FF]
        f = jnp.maximum(f, 0.0)
        x = x + jnp.dot(f.astype(jnp.bfloat16), w_ref[W_FF2(l), :D_FF, :d],
                        preferred_element_type=jnp.float32) + b_ref[R_B2(l):R_B2(l) + 1, :d]

    # --- final LayerNorm of the stack, output linear (vocab padded to 128
    #     lanes; padded columns carry -1e9 bias), then log_softmax(dim=-1)
    x = layer_norm(x, R_LNFG, R_LNFB)
    logits = jnp.dot(x.astype(jnp.bfloat16), w_ref[W_OUT, :d, :],
                     preferred_element_type=jnp.float32) + b_ref[R_BOUT:R_BOUT + 1, :]
    z = logits - jnp.max(logits, axis=-1, keepdims=True)
    lse = jnp.log(jnp.sum(jnp.exp(z), axis=-1, keepdims=True))
    o_ref[...] = z - lse                                           # (BS, VOCAB_PAD)


# ----------------------------- wrapper / glue ----------------------------------
def full_transformer_forward(packed, input_sequence, mask):
    """input_sequence: (B, S) int tokens; mask: (B, 1, S, S) with 1=keep, 0=mask."""
    B, S = input_sequence.shape
    BS = B * S
    tok = input_sequence.astype(jnp.int32).reshape(BS, 1)

    # precomputed additive attention bias, block-diagonal over the folded batch:
    # within a batch element use the runtime mask (0 keep / -1e9 masked),
    # across batch elements always -1e9.
    mask3 = mask.astype(jnp.float32).reshape(B, S, S)
    per_b_bias = jnp.where(mask3 < 0.5, jnp.float32(-1e9), jnp.float32(0.0))
    big = jnp.full((B, S, B, S), -1e9, jnp.float32)
    big = big.at[jnp.arange(B), :, jnp.arange(B), :].set(per_b_bias)
    attn_bias = big.reshape(BS, BS)

    out_pad = pl.pallas_call(
        _fused_transformer_kernel,
        grid=(1,),                                   # single step: whole forward resident in VMEM
        in_specs=[
            pl.BlockSpec((BS, 1), lambda i: (0, 0)),                       # tokens
            pl.BlockSpec((BS, BS), lambda i: (0, 0)),                      # additive attention bias
            pl.BlockSpec((BS, D_MODEL), lambda i: (0, 0)),                 # positional encoding (tiled)
            pl.BlockSpec(packed["wslab"].shape, lambda i: (0, 0, 0)),      # all weights (bf16 slab)
            pl.BlockSpec(packed["bslab"].shape, lambda i: (0, 0)),         # all biases / LN params
        ],
        out_specs=pl.BlockSpec((BS, VOCAB_PAD), lambda i: (0, 0)),
        out_shape=jax.ShapeDtypeStruct((BS, VOCAB_PAD), jnp.float32),
        compiler_params=pltpu.CompilerParams(dimension_semantics=("arbitrary",)),
    )(tok, attn_bias, packed["pe"], packed["wslab"], packed["bslab"])

    # drop the padded vocab lanes (tiny; keeps the module's (B, S, VOCAB) contract)
    return out_pad.reshape(B, S, VOCAB_PAD)[:, :, :VOCAB]


# ----------------------------- parameter construction -------------------------
def positional_encoding(S, d):
    pos = jnp.arange(S, dtype=jnp.float32)[:, None]
    div = jnp.exp(jnp.arange(0, d, 2, dtype=jnp.float32) * (-math.log(10000.0) / d))
    pe = jnp.zeros((S, d), dtype=jnp.float32)
    pe = pe.at[:, 0::2].set(jnp.sin(pos * div))
    pe = pe.at[:, 1::2].set(jnp.cos(pos * div))
    return pe


def init_params(key):
    """Logical (module-like) parameters."""
    def nrm(k, shape, scale=0.02):
        return scale * jax.random.normal(k, shape, dtype=jnp.float32)

    keys = iter(jax.random.split(key, 64))
    params = {
        "emb": nrm(next(keys), (VOCAB, D_MODEL), 1.0 / math.sqrt(D_MODEL)),
        "blocks": [],
        "ln_g": jnp.ones((1, D_MODEL), jnp.float32),
        "ln_b": jnp.zeros((1, D_MODEL), jnp.float32),
        "out_w": nrm(next(keys), (D_MODEL, VOCAB)),
        "out_b": jnp.zeros((1, VOCAB), jnp.float32),
    }
    for _ in range(N_BLOCKS):
        blk = {
            "wq": nrm(next(keys), (D_MODEL, D_MODEL)), "bq": jnp.zeros((1, D_MODEL), jnp.float32),
            "wk": nrm(next(keys), (D_MODEL, D_MODEL)), "bk": jnp.zeros((1, D_MODEL), jnp.float32),
            "wv": nrm(next(keys), (D_MODEL, D_MODEL)), "bv": jnp.zeros((1, D_MODEL), jnp.float32),
            "wo": nrm(next(keys), (D_MODEL, D_MODEL)), "bo": jnp.zeros((1, D_MODEL), jnp.float32),
            "ln1_g": jnp.ones((1, D_MODEL), jnp.float32), "ln1_b": jnp.zeros((1, D_MODEL), jnp.float32),
            "ln2_g": jnp.ones((1, D_MODEL), jnp.float32), "ln2_b": jnp.zeros((1, D_MODEL), jnp.float32),
            "ff_w1": nrm(next(keys), (D_MODEL, D_FF)), "ff_b1": jnp.zeros((1, D_FF), jnp.float32),
            "ff_w2": nrm(next(keys), (D_FF, D_MODEL)), "ff_b2": jnp.zeros((1, D_MODEL), jnp.float32),
        }
        params["blocks"].append(blk)
    return params


def pack_params(p):
    """One-time repack into the fused-kernel layout:
       - all weight matrices into a single (N_WSLAB, 128, 128) bf16 slab
         (QKV fused per block, 1/sqrt(dk) folded into q, sqrt(D) folded into emb,
          vocab padded to 128 lanes),
       - all bias / LayerNorm vectors into a single (N_BROWS_PAD, 128) f32 slab,
       - positional encoding tiled to (B*S, D)."""
    d = D_MODEL
    q_scale = 1.0 / math.sqrt(D_K)

    wslab = jnp.zeros((N_WSLAB, 128, 128), jnp.float32)
    wslab = wslab.at[W_EMB, :VOCAB, :d].set(p["emb"] * math.sqrt(float(d)))
    for l, blk in enumerate(p["blocks"]):
        wqkv = jnp.concatenate([blk["wq"] * q_scale, blk["wk"], blk["wv"]], axis=1)   # (D, 3D)
        wslab = wslab.at[W_QKV(l), :d, :3 * d].set(wqkv)
        wslab = wslab.at[W_O(l), :d, :d].set(blk["wo"])
        wslab = wslab.at[W_FF1(l), :d, :D_FF].set(blk["ff_w1"])
        wslab = wslab.at[W_FF2(l), :D_FF, :d].set(blk["ff_w2"])
    wslab = wslab.at[W_OUT, :d, :VOCAB].set(p["out_w"])
    wslab = wslab.astype(jnp.bfloat16)

    bslab = jnp.zeros((N_BROWS_PAD, 128), jnp.float32)
    for l, blk in enumerate(p["blocks"]):
        bqkv = jnp.concatenate([blk["bq"] * q_scale, blk["bk"], blk["bv"]], axis=1)   # (1, 3D)
        bslab = bslab.at[R_BQKV(l), :3 * d].set(bqkv[0])
        bslab = bslab.at[R_BO(l), :d].set(blk["bo"][0])
        bslab = bslab.at[R_B1(l), :D_FF].set(blk["ff_b1"][0])
        bslab = bslab.at[R_B2(l), :d].set(blk["ff_b2"][0])
        bslab = bslab.at[R_LN1G(l), :d].set(blk["ln1_g"][0])
        bslab = bslab.at[R_LN1B(l), :d].set(blk["ln1_b"][0])
        bslab = bslab.at[R_LN2G(l), :d].set(blk["ln2_g"][0])
        bslab = bslab.at[R_LN2B(l), :d].set(blk["ln2_b"][0])
    bslab = bslab.at[R_LNFG, :d].set(p["ln_g"][0])
    bslab = bslab.at[R_LNFB, :d].set(p["ln_b"][0])
    bout_pad = jnp.full((128,), -1e9, jnp.float32).at[:VOCAB].set(p["out_b"][0])
    bslab = bslab.at[R_BOUT, :].set(bout_pad)

    pe = jnp.tile(positional_encoding(SEQ, d), (BATCH, 1))                            # (B*S, D)

    return {"wslab": wslab, "bslab": bslab, "pe": pe}


# ----------------------------- main ------------------------------------------
if __name__ == "__main__":
    key = jax.random.PRNGKey(0)
    k_param, k_tok = jax.random.split(key)

    packed = pack_params(init_params(k_param))
    tokens = jax.random.randint(k_tok, (BATCH, SEQ), 0, VOCAB, dtype=jnp.int32)
    # causal (subsequent) mask, shape (B, 1, S, S), 1 = attend, 0 = masked
    causal = jnp.tril(jnp.ones((SEQ, SEQ), dtype=jnp.float32))
    mask = jnp.broadcast_to(causal[None, None], (BATCH, 1, SEQ, SEQ))

    fwd = jax.jit(full_transformer_forward)
    log_probs = fwd(packed, tokens, mask)
    jax.block_until_ready(log_probs)

    assert log_probs.shape == (BATCH, SEQ, VOCAB)
    # log_softmax sanity: each row exponentiates and sums to 1
    row_sums = jnp.exp(log_probs).sum(axis=-1)
    assert bool(jnp.all(jnp.abs(row_sums - 1.0) < 1e-3))
    assert bool(jnp.all(jnp.isfinite(log_probs)))

    print("KERNEL_OK")
</pallas_src>

<mosaic_0001>
module attributes {stable_mosaic.version = 11 : i64} {
  func.func @_fused_transformer_kernel(%arg0: i32, %arg1: memref<16x1xi32, #tpu.memory_space<vmem>>, %arg2: memref<16x16xf32, #tpu.memory_space<vmem>>, %arg3: memref<16x32xf32, #tpu.memory_space<vmem>>, %arg4: memref<10x128x128xbf16, #tpu.memory_space<vmem>>, %arg5: memref<24x128xf32, #tpu.memory_space<vmem>>, %arg6: memref<16x128xf32, #tpu.memory_space<vmem>>) attributes {dimension_semantics = [#tpu.dimension_semantics<arbitrary>], iteration_bounds = array<i64: 1>, scalar_prefetch = 0 : i64, scratch_operands = 0 : i64, tpu.core_type = #tpu.core_type<tc>, window_params = [{pipeline_mode = #tpu.pipeline_mode<synchronous>, transform_indices = @transform_0, window_bounds = array<i64: 16, 1>}, {pipeline_mode = #tpu.pipeline_mode<synchronous>, transform_indices = @transform_1, window_bounds = array<i64: 16, 16>}, {pipeline_mode = #tpu.pipeline_mode<synchronous>, transform_indices = @transform_2, window_bounds = array<i64: 16, 32>}, {pipeline_mode = #tpu.pipeline_mode<synchronous>, transform_indices = @transform_3, window_bounds = array<i64: 10, 128, 128>}, {pipeline_mode = #tpu.pipeline_mode<synchronous>, transform_indices = @transform_4, window_bounds = array<i64: 24, 128>}, {pipeline_mode = #tpu.pipeline_mode<synchronous>, transform_indices = @transform_5, window_bounds = array<i64: 16, 128>}]} {
    %c0 = arith.constant 0 : index
    %c0_0 = arith.constant 0 : index
    %0 = vector.load %arg1[%c0, %c0_0] : memref<16x1xi32, #tpu.memory_space<vmem>>, vector<16x1xi32>
    %1 = tpu.iota {dimensions = array<i32: 1>} : vector<16x128xi32>
    %2 = vector.broadcast %0 : vector<16x1xi32> to vector<16x128xi32>
    %3 = arith.cmpi eq, %1, %2 : vector<16x128xi32>
    %4 = arith.extui %3 : vector<16x128xi1> to vector<16x128xi32>
    %5 = arith.sitofp %4 : vector<16x128xi32> to vector<16x128xf32>
    %6 = arith.truncf %5 : vector<16x128xf32> to vector<16x128xbf16>
    %c0_1 = arith.constant 0 : index
    %c0_2 = arith.constant 0 : index
    %c0_3 = arith.constant 0 : index
    %7 = vector.load %arg4[%c0_1, %c0_2, %c0_3] : memref<10x128x128xbf16, #tpu.memory_space<vmem>>, vector<1x128x32xbf16>
    %8 = vector.shape_cast %7 : vector<1x128x32xbf16> to vector<128x32xbf16>
    %cst = arith.constant dense<0.000000e+00> : vector<16x32xf32>
    %9 = tpu.matmul %6, %8, %cst {dimension_numbers = #tpu.dot_dimension_numbers<[1], [0], [0], [1], [0, 0, 1, 1], [], []>} : vector<16x128xbf16>, vector<128x32xbf16>, vector<16x32xf32> -> vector<16x32xf32>
    %c0_4 = arith.constant 0 : index
    %c0_5 = arith.constant 0 : index
    %10 = vector.load %arg3[%c0_4, %c0_5] : memref<16x32xf32, #tpu.memory_space<vmem>>, vector<16x32xf32>
    %11 = arith.addf %9, %10 : vector<16x32xf32>
    %c0_6 = arith.constant 0 : index
    %c0_7 = arith.constant 0 : index
    %12 = vector.load %arg2[%c0_6, %c0_7] : memref<16x16xf32, #tpu.memory_space<vmem>>, vector<16x16xf32>
    %c4 = arith.constant 4 : index
    %c0_8 = arith.constant 0 : index
    %13 = vector.load %arg5[%c4, %c0_8] : memref<24x128xf32, #tpu.memory_space<vmem>>, vector<1x32xf32>
    %c5 = arith.constant 5 : index
    %c0_9 = arith.constant 0 : index
    %14 = vector.load %arg5[%c5, %c0_9] : memref<24x128xf32, #tpu.memory_space<vmem>>, vector<1x32xf32>
    %cst_10 = arith.constant dense<0.000000e+00> : vector<16xf32>
    %15 = vector.multi_reduction <add>, %11, %cst_10 [1] : vector<16x32xf32> to vector<16xf32>
    %16 = vector.shape_cast %15 : vector<16xf32> to vector<16x1xf32>
    %17 = arith.mulf %11, %11 : vector<16x32xf32>
    %cst_11 = arith.constant dense<0.000000e+00> : vector<16xf32>
    %18 = vector.multi_reduction <add>, %17, %cst_11 [1] : vector<16x32xf32> to vector<16xf32>
    %19 = vector.shape_cast %18 : vector<16xf32> to vector<16x1xf32>
    %cst_12 = arith.constant 3.125000e-02 : f32
    %20 = vector.broadcast %cst_12 : f32 to vector<16x1xf32>
    %21 = arith.mulf %16, %20 : vector<16x1xf32>
    %cst_13 = arith.constant 3.125000e-02 : f32
    %22 = vector.broadcast %cst_13 : f32 to vector<16x1xf32>
    %23 = arith.mulf %19, %22 : vector<16x1xf32>
    %24 = arith.mulf %21, %21 : vector<16x1xf32>
    %25 = arith.subf %23, %24 : vector<16x1xf32>
    %26 = vector.broadcast %21 : vector<16x1xf32> to vector<16x32xf32>
    %27 = arith.subf %11, %26 : vector<16x32xf32>
    %cst_14 = arith.constant 9.99999974E-6 : f32
    %28 = vector.broadcast %cst_14 : f32 to vector<16x1xf32>
    %29 = arith.addf %25, %28 : vector<16x1xf32>
    %30 = math.rsqrt %29 : vector<16x1xf32>
    %31 = vector.broadcast %30 : vector<16x1xf32> to vector<16x32xf32>
    %32 = arith.mulf %27, %31 : vector<16x32xf32>
    %33 = vector.broadcast %13 : vector<1x32xf32> to vector<16x32xf32>
    %34 = arith.mulf %32, %33 : vector<16x32xf32>
    %35 = vector.broadcast %14 : vector<1x32xf32> to vector<16x32xf32>
    %36 = arith.addf %34, %35 : vector<16x32xf32>
    %37 = arith.truncf %36 : vector<16x32xf32> to vector<16x32xbf16>
    %c1 = arith.constant 1 : index
    %c0_15 = arith.constant 0 : index
    %c0_16 = arith.constant 0 : index
    %38 = vector.load %arg4[%c1, %c0_15, %c0_16] : memref<10x128x128xbf16, #tpu.memory_space<vmem>>, vector<1x32x96xbf16>
    %39 = vector.shape_cast %38 : vector<1x32x96xbf16> to vector<32x96xbf16>
    %cst_17 = arith.constant dense<0.000000e+00> : vector<16x96xf32>
    %40 = tpu.matmul %37, %39, %cst_17 {dimension_numbers = #tpu.dot_dimension_numbers<[1], [0], [0], [1], [0, 0, 1, 1], [], []>} : vector<16x32xbf16>, vector<32x96xbf16>, vector<16x96xf32> -> vector<16x96xf32>
    %c0_18 = arith.constant 0 : index
    %c0_19 = arith.constant 0 : index
    %41 = vector.load %arg5[%c0_18, %c0_19] : memref<24x128xf32, #tpu.memory_space<vmem>>, vector<1x96xf32>
    %42 = vector.broadcast %41 : vector<1x96xf32> to vector<16x96xf32>
    %43 = arith.addf %40, %42 : vector<16x96xf32>
    %44 = vector.extract_strided_slice %43 {offsets = [0, 0], sizes = [16, 8], strides = [1, 1]} : vector<16x96xf32> to vector<16x8xf32>
    %45 = arith.truncf %44 : vector<16x8xf32> to vector<16x8xbf16>
    %46 = vector.extract_strided_slice %43 {offsets = [0, 32], sizes = [16, 8], strides = [1, 1]} : vector<16x96xf32> to vector<16x8xf32>
    %47 = arith.truncf %46 : vector<16x8xf32> to vector<16x8xbf16>
    %48 = vector.extract_strided_slice %43 {offsets = [0, 64], sizes = [16, 8], strides = [1, 1]} : vector<16x96xf32> to vector<16x8xf32>
    %49 = arith.truncf %48 : vector<16x8xf32> to vector<16x8xbf16>
    %cst_20 = arith.constant dense<0.000000e+00> : vector<16x16xf32>
    %50 = tpu.matmul %45, %47, %cst_20 {dimension_numbers = #tpu.dot_dimension_numbers<[1], [1], [0], [0], [0, 0, 1, 0], [], []>} : vector<16x8xbf16>, vector<16x8xbf16>, vector<16x16xf32> -> vector<16x16xf32>
    %51 = arith.addf %50, %12 : vector<16x16xf32>
    %cst_21 = arith.constant dense<0xFF800000> : vector<16xf32>
    %52 = vector.multi_reduction <maximumf>, %51, %cst_21 [1] : vector<16x16xf32> to vector<16xf32>
    %53 = vector.shape_cast %52 : vector<16xf32> to vector<16x1xf32>
    %54 = vector.broadcast %53 : vector<16x1xf32> to vector<16x16xf32>
    %55 = arith.subf %51, %54 : vector<16x16xf32>
    %56 = math.exp %55 : vector<16x16xf32>
    %cst_22 = arith.constant dense<0.000000e+00> : vector<16xf32>
    %57 = vector.multi_reduction <add>, %56, %cst_22 [1] : vector<16x16xf32> to vector<16xf32>
    %58 = vector.shape_cast %57 : vector<16xf32> to vector<16x1xf32>
    %59 = tpu.reciprocal %58 {approx = true} : vector<16x1xf32> -> vector<16x1xf32>
    %60 = vector.broadcast %59 : vector<16x1xf32> to vector<16x16xf32>
    %61 = arith.mulf %56, %60 : vector<16x16xf32>
    %62 = arith.truncf %61 : vector<16x16xf32> to vector<16x16xbf16>
    %cst_23 = arith.constant dense<0.000000e+00> : vector<16x8xf32>
    %63 = tpu.matmul %62, %49, %cst_23 {dimension_numbers = #tpu.dot_dimension_numbers<[1], [0], [0], [1], [0, 0, 1, 1], [], []>} : vector<16x16xbf16>, vector<16x8xbf16>, vector<16x8xf32> -> vector<16x8xf32>
    %64 = vector.extract_strided_slice %43 {offsets = [0, 8], sizes = [16, 8], strides = [1, 1]} : vector<16x96xf32> to vector<16x8xf32>
    %65 = arith.truncf %64 : vector<16x8xf32> to vector<16x8xbf16>
    %66 = vector.extract_strided_slice %43 {offsets = [0, 40], sizes = [16, 8], strides = [1, 1]} : vector<16x96xf32> to vector<16x8xf32>
    %67 = arith.truncf %66 : vector<16x8xf32> to vector<16x8xbf16>
    %68 = vector.extract_strided_slice %43 {offsets = [0, 72], sizes = [16, 8], strides = [1, 1]} : vector<16x96xf32> to vector<16x8xf32>
    %69 = arith.truncf %68 : vector<16x8xf32> to vector<16x8xbf16>
    %cst_24 = arith.constant dense<0.000000e+00> : vector<16x16xf32>
    %70 = tpu.matmul %65, %67, %cst_24 {dimension_numbers = #tpu.dot_dimension_numbers<[1], [1], [0], [0], [0, 0, 1, 0], [], []>} : vector<16x8xbf16>, vector<16x8xbf16>, vector<16x16xf32> -> vector<16x16xf32>
    %71 = arith.addf %70, %12 : vector<16x16xf32>
    %cst_25 = arith.constant dense<0xFF800000> : vector<16xf32>
    %72 = vector.multi_reduction <maximumf>, %71, %cst_25 [1] : vector<16x16xf32> to vector<16xf32>
    %73 = vector.shape_cast %72 : vector<16xf32> to vector<16x1xf32>
    %74 = vector.broadcast %73 : vector<16x1xf32> to vector<16x16xf32>
    %75 = arith.subf %71, %74 : vector<16x16xf32>
    %76 = math.exp %75 : vector<16x16xf32>
    %cst_26 = arith.constant dense<0.000000e+00> : vector<16xf32>
    %77 = vector.multi_reduction <add>, %76, %cst_26 [1] : vector<16x16xf32> to vector<16xf32>
    %78 = vector.shape_cast %77 : vector<16xf32> to vector<16x1xf32>
    %79 = tpu.reciprocal %78 {approx = true} : vector<16x1xf32> -> vector<16x1xf32>
    %80 = vector.broadcast %79 : vector<16x1xf32> to vector<16x16xf32>
    %81 = arith.mulf %76, %80 : vector<16x16xf32>
    %82 = arith.truncf %81 : vector<16x16xf32> to vector<16x16xbf16>
    %cst_27 = arith.constant dense<0.000000e+00> : vector<16x8xf32>
    %83 = tpu.matmul %82, %69, %cst_27 {dimension_numbers = #tpu.dot_dimension_numbers<[1], [0], [0], [1], [0, 0, 1, 1], [], []>} : vector<16x16xbf16>, vector<16x8xbf16>, vector<16x8xf32> -> vector<16x8xf32>
    %84 = vector.extract_strided_slice %43 {offsets = [0, 16], sizes = [16, 8], strides = [1, 1]} : vector<16x96xf32> to vector<16x8xf32>
    %85 = arith.truncf %84 : vector<16x8xf32> to vector<16x8xbf16>
    %86 = vector.extract_strided_slice %43 {offsets = [0, 48], sizes = [16, 8], strides = [1, 1]} : vector<16x96xf32> to vector<16x8xf32>
    %87 = arith.truncf %86 : vector<16x8xf32> to vector<16x8xbf16>
    %88 = vector.extract_strided_slice %43 {offsets = [0, 80], sizes = [16, 8], strides = [1, 1]} : vector<16x96xf32> to vector<16x8xf32>
    %89 = arith.truncf %88 : vector<16x8xf32> to vector<16x8xbf16>
    %cst_28 = arith.constant dense<0.000000e+00> : vector<16x16xf32>
    %90 = tpu.matmul %85, %87, %cst_28 {dimension_numbers = #tpu.dot_dimension_numbers<[1], [1], [0], [0], [0, 0, 1, 0], [], []>} : vector<16x8xbf16>, vector<16x8xbf16>, vector<16x16xf32> -> vector<16x16xf32>
    %91 = arith.addf %90, %12 : vector<16x16xf32>
    %cst_29 = arith.constant dense<0xFF800000> : vector<16xf32>
    %92 = vector.multi_reduction <maximumf>, %91, %cst_29 [1] : vector<16x16xf32> to vector<16xf32>
    %93 = vector.shape_cast %92 : vector<16xf32> to vector<16x1xf32>
    %94 = vector.broadcast %93 : vector<16x1xf32> to vector<16x16xf32>
    %95 = arith.subf %91, %94 : vector<16x16xf32>
    %96 = math.exp %95 : vector<16x16xf32>
    %cst_30 = arith.constant dense<0.000000e+00> : vector<16xf32>
    %97 = vector.multi_reduction <add>, %96, %cst_30 [1] : vector<16x16xf32> to vector<16xf32>
    %98 = vector.shape_cast %97 : vector<16xf32> to vector<16x1xf32>
    %99 = tpu.reciprocal %98 {approx = true} : vector<16x1xf32> -> vector<16x1xf32>
    %100 = vector.broadcast %99 : vector<16x1xf32> to vector<16x16xf32>
    %101 = arith.mulf %96, %100 : vector<16x16xf32>
    %102 = arith.truncf %101 : vector<16x16xf32> to vector<16x16xbf16>
    %cst_31 = arith.constant dense<0.000000e+00> : vector<16x8xf32>
    %103 = tpu.matmul %102, %89, %cst_31 {dimension_numbers = #tpu.dot_dimension_numbers<[1], [0], [0], [1], [0, 0, 1, 1], [], []>} : vector<16x16xbf16>, vector<16x8xbf16>, vector<16x8xf32> -> vector<16x8xf32>
    %104 = vector.extract_strided_slice %43 {offsets = [0, 24], sizes = [16, 8], strides = [1, 1]} : vector<16x96xf32> to vector<16x8xf32>
    %105 = arith.truncf %104 : vector<16x8xf32> to vector<16x8xbf16>
    %106 = vector.extract_strided_slice %43 {offsets = [0, 56], sizes = [16, 8], strides = [1, 1]} : vector<16x96xf32> to vector<16x8xf32>
    %107 = arith.truncf %106 : vector<16x8xf32> to vector<16x8xbf16>
    %108 = vector.extract_strided_slice %43 {offsets = [0, 88], sizes = [16, 8], strides = [1, 1]} : vector<16x96xf32> to vector<16x8xf32>
    %109 = arith.truncf %108 : vector<16x8xf32> to vector<16x8xbf16>
    %cst_32 = arith.constant dense<0.000000e+00> : vector<16x16xf32>
    %110 = tpu.matmul %105, %107, %cst_32 {dimension_numbers = #tpu.dot_dimension_numbers<[1], [1], [0], [0], [0, 0, 1, 0], [], []>} : vector<16x8xbf16>, vector<16x8xbf16>, vector<16x16xf32> -> vector<16x16xf32>
    %111 = arith.addf %110, %12 : vector<16x16xf32>
    %cst_33 = arith.constant dense<0xFF800000> : vector<16xf32>
    %112 = vector.multi_reduction <maximumf>, %111, %cst_33 [1] : vector<16x16xf32> to vector<16xf32>
    %113 = vector.shape_cast %112 : vector<16xf32> to vector<16x1xf32>
    %114 = vector.broadcast %113 : vector<16x1xf32> to vector<16x16xf32>
    %115 = arith.subf %111, %114 : vector<16x16xf32>
    %116 = math.exp %115 : vector<16x16xf32>
    %cst_34 = arith.constant dense<0.000000e+00> : vector<16xf32>
    %117 = vector.multi_reduction <add>, %116, %cst_34 [1] : vector<16x16xf32> to vector<16xf32>
    %118 = vector.shape_cast %117 : vector<16xf32> to vector<16x1xf32>
    %119 = tpu.reciprocal %118 {approx = true} : vector<16x1xf32> -> vector<16x1xf32>
    %120 = vector.broadcast %119 : vector<16x1xf32> to vector<16x16xf32>
    %121 = arith.mulf %116, %120 : vector<16x16xf32>
    %122 = arith.truncf %121 : vector<16x16xf32> to vector<16x16xbf16>
    %cst_35 = arith.constant dense<0.000000e+00> : vector<16x8xf32>
    %123 = tpu.matmul %122, %109, %cst_35 {dimension_numbers = #tpu.dot_dimension_numbers<[1], [0], [0], [1], [0, 0, 1, 1], [], []>} : vector<16x16xbf16>, vector<16x8xbf16>, vector<16x8xf32> -> vector<16x8xf32>
    %124 = tpu.concatenate %63, %83, %103, %123 in 1 : vector<16x8xf32>, vector<16x8xf32>, vector<16x8xf32>, vector<16x8xf32> -> vector<16x32xf32>
    %125 = arith.truncf %124 : vector<16x32xf32> to vector<16x32xbf16>
    %c2 = arith.constant 2 : index
    %c0_36 = arith.constant 0 : index
    %c0_37 = arith.constant 0 : index
    %126 = vector.load %arg4[%c2, %c0_36, %c0_37] : memref<10x128x128xbf16, #tpu.memory_space<vmem>>, vector<1x32x32xbf16>
    %127 = vector.shape_cast %126 : vector<1x32x32xbf16> to vector<32x32xbf16>
    %cst_38 = arith.constant dense<0.000000e+00> : vector<16x32xf32>
    %128 = tpu.matmul %125, %127, %cst_38 {dimension_numbers = #tpu.dot_dimension_numbers<[1], [0], [0], [1], [0, 0, 1, 1], [], []>} : vector<16x32xbf16>, vector<32x32xbf16>, vector<16x32xf32> -> vector<16x32xf32>
    %c1_39 = arith.constant 1 : index
    %c0_40 = arith.constant 0 : index
    %129 = vector.load %arg5[%c1_39, %c0_40] : memref<24x128xf32, #tpu.memory_space<vmem>>, vector<1x32xf32>
    %130 = vector.broadcast %129 : vector<1x32xf32> to vector<16x32xf32>
    %131 = arith.addf %128, %130 : vector<16x32xf32>
    %132 = arith.addf %11, %131 : vector<16x32xf32>
    %c6 = arith.constant 6 : index
    %c0_41 = arith.constant 0 : index
    %133 = vector.load %arg5[%c6, %c0_41] : memref<24x128xf32, #tpu.memory_space<vmem>>, vector<1x32xf32>
    %c7 = arith.constant 7 : index
    %c0_42 = arith.constant 0 : index
    %134 = vector.load %arg5[%c7, %c0_42] : memref<24x128xf32, #tpu.memory_space<vmem>>, vector<1x32xf32>
    %cst_43 = arith.constant dense<0.000000e+00> : vector<16xf32>
    %135 = vector.multi_reduction <add>, %132, %cst_43 [1] : vector<16x32xf32> to vector<16xf32>
    %136 = vector.shape_cast %135 : vector<16xf32> to vector<16x1xf32>
    %137 = arith.mulf %132, %132 : vector<16x32xf32>
    %cst_44 = arith.constant dense<0.000000e+00> : vector<16xf32>
    %138 = vector.multi_reduction <add>, %137, %cst_44 [1] : vector<16x32xf32> to vector<16xf32>
    %139 = vector.shape_cast %138 : vector<16xf32> to vector<16x1xf32>
    %cst_45 = arith.constant 3.125000e-02 : f32
    %140 = vector.broadcast %cst_45 : f32 to vector<16x1xf32>
    %141 = arith.mulf %136, %140 : vector<16x1xf32>
    %cst_46 = arith.constant 3.125000e-02 : f32
    %142 = vector.broadcast %cst_46 : f32 to vector<16x1xf32>
    %143 = arith.mulf %139, %142 : vector<16x1xf32>
    %144 = arith.mulf %141, %141 : vector<16x1xf32>
    %145 = arith.subf %143, %144 : vector<16x1xf32>
    %146 = vector.broadcast %141 : vector<16x1xf32> to vector<16x32xf32>
    %147 = arith.subf %132, %146 : vector<16x32xf32>
    %cst_47 = arith.constant 9.99999974E-6 : f32
    %148 = vector.broadcast %cst_47 : f32 to vector<16x1xf32>
    %149 = arith.addf %145, %148 : vector<16x1xf32>
    %150 = math.rsqrt %149 : vector<16x1xf32>
    %151 = vector.broadcast %150 : vector<16x1xf32> to vector<16x32xf32>
    %152 = arith.mulf %147, %151 : vector<16x32xf32>
    %153 = vector.broadcast %133 : vector<1x32xf32> to vector<16x32xf32>
    %154 = arith.mulf %152, %153 : vector<16x32xf32>
    %155 = vector.broadcast %134 : vector<1x32xf32> to vector<16x32xf32>
    %156 = arith.addf %154, %155 : vector<16x32xf32>
    %157 = arith.truncf %156 : vector<16x32xf32> to vector<16x32xbf16>
    %c3 = arith.constant 3 : index
    %c0_48 = arith.constant 0 : index
    %c0_49 = arith.constant 0 : index
    %158 = vector.load %arg4[%c3, %c0_48, %c0_49] : memref<10x128x128xbf16, #tpu.memory_space<vmem>>, vector<1x32x64xbf16>
    %159 = vector.shape_cast %158 : vector<1x32x64xbf16> to vector<32x64xbf16>
    %cst_50 = arith.constant dense<0.000000e+00> : vector<16x64xf32>
    %160 = tpu.matmul %157, %159, %cst_50 {dimension_numbers = #tpu.dot_dimension_numbers<[1], [0], [0], [1], [0, 0, 1, 1], [], []>} : vector<16x32xbf16>, vector<32x64xbf16>, vector<16x64xf32> -> vector<16x64xf32>
    %c2_51 = arith.constant 2 : index
    %c0_52 = arith.constant 0 : index
    %161 = vector.load %arg5[%c2_51, %c0_52] : memref<24x128xf32, #tpu.memory_space<vmem>>, vector<1x64xf32>
    %162 = vector.broadcast %161 : vector<1x64xf32> to vector<16x64xf32>
    %163 = arith.addf %160, %162 : vector<16x64xf32>
    %cst_53 = arith.constant 0.000000e+00 : f32
    %164 = vector.broadcast %cst_53 : f32 to vector<16x64xf32>
    %165 = arith.maximumf %163, %164 : vector<16x64xf32>
    %166 = arith.truncf %165 : vector<16x64xf32> to vector<16x64xbf16>
    %c4_54 = arith.constant 4 : index
    %c0_55 = arith.constant 0 : index
    %c0_56 = arith.constant 0 : index
    %167 = vector.load %arg4[%c4_54, %c0_55, %c0_56] : memref<10x128x128xbf16, #tpu.memory_space<vmem>>, vector<1x64x32xbf16>
    %168 = vector.shape_cast %167 : vector<1x64x32xbf16> to vector<64x32xbf16>
    %cst_57 = arith.constant dense<0.000000e+00> : vector<16x32xf32>
    %169 = tpu.matmul %166, %168, %cst_57 {dimension_numbers = #tpu.dot_dimension_numbers<[1], [0], [0], [1], [0, 0, 1, 1], [], []>} : vector<16x64xbf16>, vector<64x32xbf16>, vector<16x32xf32> -> vector<16x32xf32>
    %170 = arith.addf %132, %169 : vector<16x32xf32>
    %c3_58 = arith.constant 3 : index
    %c0_59 = arith.constant 0 : index
    %171 = vector.load %arg5[%c3_58, %c0_59] : memref<24x128xf32, #tpu.memory_space<vmem>>, vector<1x32xf32>
    %172 = vector.broadcast %171 : vector<1x32xf32> to vector<16x32xf32>
    %173 = arith.addf %170, %172 : vector<16x32xf32>
    %c12 = arith.constant 12 : index
    %c0_60 = arith.constant 0 : index
    %174 = vector.load %arg5[%c12, %c0_60] : memref<24x128xf32, #tpu.memory_space<vmem>>, vector<1x32xf32>
    %c13 = arith.constant 13 : index
    %c0_61 = arith.constant 0 : index
    %175 = vector.load %arg5[%c13, %c0_61] : memref<24x128xf32, #tpu.memory_space<vmem>>, vector<1x32xf32>
    %cst_62 = arith.constant dense<0.000000e+00> : vector<16xf32>
    %176 = vector.multi_reduction <add>, %173, %cst_62 [1] : vector<16x32xf32> to vector<16xf32>
    %177 = vector.shape_cast %176 : vector<16xf32> to vector<16x1xf32>
    %178 = arith.mulf %173, %173 : vector<16x32xf32>
    %cst_63 = arith.constant dense<0.000000e+00> : vector<16xf32>
    %179 = vector.multi_reduction <add>, %178, %cst_63 [1] : vector<16x32xf32> to vector<16xf32>
    %180 = vector.shape_cast %179 : vector<16xf32> to vector<16x1xf32>
    %cst_64 = arith.constant 3.125000e-02 : f32
    %181 = vector.broadcast %cst_64 : f32 to vector<16x1xf32>
    %182 = arith.mulf %177, %181 : vector<16x1xf32>
    %cst_65 = arith.constant 3.125000e-02 : f32
    %183 = vector.broadcast %cst_65 : f32 to vector<16x1xf32>
    %184 = arith.mulf %180, %183 : vector<16x1xf32>
    %185 = arith.mulf %182, %182 : vector<16x1xf32>
    %186 = arith.subf %184, %185 : vector<16x1xf32>
    %187 = vector.broadcast %182 : vector<16x1xf32> to vector<16x32xf32>
    %188 = arith.subf %173, %187 : vector<16x32xf32>
    %cst_66 = arith.constant 9.99999974E-6 : f32
    %189 = vector.broadcast %cst_66 : f32 to vector<16x1xf32>
    %190 = arith.addf %186, %189 : vector<16x1xf32>
    %191 = math.rsqrt %190 : vector<16x1xf32>
    %192 = vector.broadcast %191 : vector<16x1xf32> to vector<16x32xf32>
    %193 = arith.mulf %188, %192 : vector<16x32xf32>
    %194 = vector.broadcast %174 : vector<1x32xf32> to vector<16x32xf32>
    %195 = arith.mulf %193, %194 : vector<16x32xf32>
    %196 = vector.broadcast %175 : vector<1x32xf32> to vector<16x32xf32>
    %197 = arith.addf %195, %196 : vector<16x32xf32>
    %198 = arith.truncf %197 : vector<16x32xf32> to vector<16x32xbf16>
    %c5_67 = arith.constant 5 : index
    %c0_68 = arith.constant 0 : index
    %c0_69 = arith.constant 0 : index
    %199 = vector.load %arg4[%c5_67, %c0_68, %c0_69] : memref<10x128x128xbf16, #tpu.memory_space<vmem>>, vector<1x32x96xbf16>
    %200 = vector.shape_cast %199 : vector<1x32x96xbf16> to vector<32x96xbf16>
    %cst_70 = arith.constant dense<0.000000e+00> : vector<16x96xf32>
    %201 = tpu.matmul %198, %200, %cst_70 {dimension_numbers = #tpu.dot_dimension_numbers<[1], [0], [0], [1], [0, 0, 1, 1], [], []>} : vector<16x32xbf16>, vector<32x96xbf16>, vector<16x96xf32> -> vector<16x96xf32>
    %c8 = arith.constant 8 : index
    %c0_71 = arith.constant 0 : index
    %202 = vector.load %arg5[%c8, %c0_71] : memref<24x128xf32, #tpu.memory_space<vmem>>, vector<1x96xf32>
    %203 = vector.broadcast %202 : vector<1x96xf32> to vector<16x96xf32>
    %204 = arith.addf %201, %203 : vector<16x96xf32>
    %205 = vector.extract_strided_slice %204 {offsets = [0, 0], sizes = [16, 8], strides = [1, 1]} : vector<16x96xf32> to vector<16x8xf32>
    %206 = arith.truncf %205 : vector<16x8xf32> to vector<16x8xbf16>
    %207 = vector.extract_strided_slice %204 {offsets = [0, 32], sizes = [16, 8], strides = [1, 1]} : vector<16x96xf32> to vector<16x8xf32>
    %208 = arith.truncf %207 : vector<16x8xf32> to vector<16x8xbf16>
    %209 = vector.extract_strided_slice %204 {offsets = [0, 64], sizes = [16, 8], strides = [1, 1]} : vector<16x96xf32> to vector<16x8xf32>
    %210 = arith.truncf %209 : vector<16x8xf32> to vector<16x8xbf16>
    %cst_72 = arith.constant dense<0.000000e+00> : vector<16x16xf32>
    %211 = tpu.matmul %206, %208, %cst_72 {dimension_numbers = #tpu.dot_dimension_numbers<[1], [1], [0], [0], [0, 0, 1, 0], [], []>} : vector<16x8xbf16>, vector<16x8xbf16>, vector<16x16xf32> -> vector<16x16xf32>
    %212 = arith.addf %211, %12 : vector<16x16xf32>
    %cst_73 = arith.constant dense<0xFF800000> : vector<16xf32>
    %213 = vector.multi_reduction <maximumf>, %212, %cst_73 [1] : vector<16x16xf32> to vector<16xf32>
    %214 = vector.shape_cast %213 : vector<16xf32> to vector<16x1xf32>
    %215 = vector.broadcast %214 : vector<16x1xf32> to vector<16x16xf32>
    %216 = arith.subf %212, %215 : vector<16x16xf32>
    %217 = math.exp %216 : vector<16x16xf32>
    %cst_74 = arith.constant dense<0.000000e+00> : vector<16xf32>
    %218 = vector.multi_reduction <add>, %217, %cst_74 [1] : vector<16x16xf32> to vector<16xf32>
    %219 = vector.shape_cast %218 : vector<16xf32> to vector<16x1xf32>
    %220 = tpu.reciprocal %219 {approx = true} : vector<16x1xf32> -> vector<16x1xf32>
    %221 = vector.broadcast %220 : vector<16x1xf32> to vector<16x16xf32>
    %222 = arith.mulf %217, %221 : vector<16x16xf32>
    %223 = arith.truncf %222 : vector<16x16xf32> to vector<16x16xbf16>
    %cst_75 = arith.constant dense<0.000000e+00> : vector<16x8xf32>
    %224 = tpu.matmul %223, %210, %cst_75 {dimension_numbers = #tpu.dot_dimension_numbers<[1], [0], [0], [1], [0, 0, 1, 1], [], []>} : vector<16x16xbf16>, vector<16x8xbf16>, vector<16x8xf32> -> vector<16x8xf32>
    %225 = vector.extract_strided_slice %204 {offsets = [0, 8], sizes = [16, 8], strides = [1, 1]} : vector<16x96xf32> to vector<16x8xf32>
    %226 = arith.truncf %225 : vector<16x8xf32> to vector<16x8xbf16>
    %227 = vector.extract_strided_slice %204 {offsets = [0, 40], sizes = [16, 8], strides = [1, 1]} : vector<16x96xf32> to vector<16x8xf32>
    %228 = arith.truncf %227 : vector<16x8xf32> to vector<16x8xbf16>
    %229 = vector.extract_strided_slice %204 {offsets = [0, 72], sizes = [16, 8], strides = [1, 1]} : vector<16x96xf32> to vector<16x8xf32>
    %230 = arith.truncf %229 : vector<16x8xf32> to vector<16x8xbf16>
    %cst_76 = arith.constant dense<0.000000e+00> : vector<16x16xf32>
    %231 = tpu.matmul %226, %228, %cst_76 {dimension_numbers = #tpu.dot_dimension_numbers<[1], [1], [0], [0], [0, 0, 1, 0], [], []>} : vector<16x8xbf16>, vector<16x8xbf16>, vector<16x16xf32> -> vector<16x16xf32>
    %232 = arith.addf %231, %12 : vector<16x16xf32>
    %cst_77 = arith.constant dense<0xFF800000> : vector<16xf32>
    %233 = vector.multi_reduction <maximumf>, %232, %cst_77 [1] : vector<16x16xf32> to vector<16xf32>
    %234 = vector.shape_cast %233 : vector<16xf32> to vector<16x1xf32>
    %235 = vector.broadcast %234 : vector<16x1xf32> to vector<16x16xf32>
    %236 = arith.subf %232, %235 : vector<16x16xf32>
    %237 = math.exp %236 : vector<16x16xf32>
    %cst_78 = arith.constant dense<0.000000e+00> : vector<16xf32>
    %238 = vector.multi_reduction <add>, %237, %cst_78 [1] : vector<16x16xf32> to vector<16xf32>
    %239 = vector.shape_cast %238 : vector<16xf32> to vector<16x1xf32>
    %240 = tpu.reciprocal %239 {approx = true} : vector<16x1xf32> -> vector<16x1xf32>
    %241 = vector.broadcast %240 : vector<16x1xf32> to vector<16x16xf32>
    %242 = arith.mulf %237, %241 : vector<16x16xf32>
    %243 = arith.truncf %242 : vector<16x16xf32> to vector<16x16xbf16>
    %cst_79 = arith.constant dense<0.000000e+00> : vector<16x8xf32>
    %244 = tpu.matmul %243, %230, %cst_79 {dimension_numbers = #tpu.dot_dimension_numbers<[1], [0], [0], [1], [0, 0, 1, 1], [], []>} : vector<16x16xbf16>, vector<16x8xbf16>, vector<16x8xf32> -> vector<16x8xf32>
    %245 = vector.extract_strided_slice %204 {offsets = [0, 16], sizes = [16, 8], strides = [1, 1]} : vector<16x96xf32> to vector<16x8xf32>
    %246 = arith.truncf %245 : vector<16x8xf32> to vector<16x8xbf16>
    %247 = vector.extract_strided_slice %204 {offsets = [0, 48], sizes = [16, 8], strides = [1, 1]} : vector<16x96xf32> to vector<16x8xf32>
    %248 = arith.truncf %247 : vector<16x8xf32> to vector<16x8xbf16>
    %249 = vector.extract_strided_slice %204 {offsets = [0, 80], sizes = [16, 8], strides = [1, 1]} : vector<16x96xf32> to vector<16x8xf32>
    %250 = arith.truncf %249 : vector<16x8xf32> to vector<16x8xbf16>
    %cst_80 = arith.constant dense<0.000000e+00> : vector<16x16xf32>
    %251 = tpu.matmul %246, %248, %cst_80 {dimension_numbers = #tpu.dot_dimension_numbers<[1], [1], [0], [0], [0, 0, 1, 0], [], []>} : vector<16x8xbf16>, vector<16x8xbf16>, vector<16x16xf32> -> vector<16x16xf32>
    %252 = arith.addf %251, %12 : vector<16x16xf32>
    %cst_81 = arith.constant dense<0xFF800000> : vector<16xf32>
    %253 = vector.multi_reduction <maximumf>, %252, %cst_81 [1] : vector<16x16xf32> to vector<16xf32>
    %254 = vector.shape_cast %253 : vector<16xf32> to vector<16x1xf32>
    %255 = vector.broadcast %254 : vector<16x1xf32> to vector<16x16xf32>
    %256 = arith.subf %252, %255 : vector<16x16xf32>
    %257 = math.exp %256 : vector<16x16xf32>
    %cst_82 = arith.constant dense<0.000000e+00> : vector<16xf32>
    %258 = vector.multi_reduction <add>, %257, %cst_82 [1] : vector<16x16xf32> to vector<16xf32>
    %259 = vector.shape_cast %258 : vector<16xf32> to vector<16x1xf32>
    %260 = tpu.reciprocal %259 {approx = true} : vector<16x1xf32> -> vector<16x1xf32>
    %261 = vector.broadcast %260 : vector<16x1xf32> to vector<16x16xf32>
    %262 = arith.mulf %257, %261 : vector<16x16xf32>
    %263 = arith.truncf %262 : vector<16x16xf32> to vector<16x16xbf16>
    %cst_83 = arith.constant dense<0.000000e+00> : vector<16x8xf32>
    %264 = tpu.matmul %263, %250, %cst_83 {dimension_numbers = #tpu.dot_dimension_numbers<[1], [0], [0], [1], [0, 0, 1, 1], [], []>} : vector<16x16xbf16>, vector<16x8xbf16>, vector<16x8xf32> -> vector<16x8xf32>
    %265 = vector.extract_strided_slice %204 {offsets = [0, 24], sizes = [16, 8], strides = [1, 1]} : vector<16x96xf32> to vector<16x8xf32>
    %266 = arith.truncf %265 : vector<16x8xf32> to vector<16x8xbf16>
    %267 = vector.extract_strided_slice %204 {offsets = [0, 56], sizes = [16, 8], strides = [1, 1]} : vector<16x96xf32> to vector<16x8xf32>
    %268 = arith.truncf %267 : vector<16x8xf32> to vector<16x8xbf16>
    %269 = vector.extract_strided_slice %204 {offsets = [0, 88], sizes = [16, 8], strides = [1, 1]} : vector<16x96xf32> to vector<16x8xf32>
    %270 = arith.truncf %269 : vector<16x8xf32> to vector<16x8xbf16>
    %cst_84 = arith.constant dense<0.000000e+00> : vector<16x16xf32>
    %271 = tpu.matmul %266, %268, %cst_84 {dimension_numbers = #tpu.dot_dimension_numbers<[1], [1], [0], [0], [0, 0, 1, 0], [], []>} : vector<16x8xbf16>, vector<16x8xbf16>, vector<16x16xf32> -> vector<16x16xf32>
    %272 = arith.addf %271, %12 : vector<16x16xf32>
    %cst_85 = arith.constant dense<0xFF800000> : vector<16xf32>
    %273 = vector.multi_reduction <maximumf>, %272, %cst_85 [1] : vector<16x16xf32> to vector<16xf32>
    %274 = vector.shape_cast %273 : vector<16xf32> to vector<16x1xf32>
    %275 = vector.broadcast %274 : vector<16x1xf32> to vector<16x16xf32>
    %276 = arith.subf %272, %275 : vector<16x16xf32>
    %277 = math.exp %276 : vector<16x16xf32>
    %cst_86 = arith.constant dense<0.000000e+00> : vector<16xf32>
    %278 = vector.multi_reduction <add>, %277, %cst_86 [1] : vector<16x16xf32> to vector<16xf32>
    %279 = vector.shape_cast %278 : vector<16xf32> to vector<16x1xf32>
    %280 = tpu.reciprocal %279 {approx = true} : vector<16x1xf32> -> vector<16x1xf32>
    %281 = vector.broadcast %280 : vector<16x1xf32> to vector<16x16xf32>
    %282 = arith.mulf %277, %281 : vector<16x16xf32>
    %283 = arith.truncf %282 : vector<16x16xf32> to vector<16x16xbf16>
    %cst_87 = arith.constant dense<0.000000e+00> : vector<16x8xf32>
    %284 = tpu.matmul %283, %270, %cst_87 {dimension_numbers = #tpu.dot_dimension_numbers<[1], [0], [0], [1], [0, 0, 1, 1], [], []>} : vector<16x16xbf16>, vector<16x8xbf16>, vector<16x8xf32> -> vector<16x8xf32>
    %285 = tpu.concatenate %224, %244, %264, %284 in 1 : vector<16x8xf32>, vector<16x8xf32>, vector<16x8xf32>, vector<16x8xf32> -> vector<16x32xf32>
    %286 = arith.truncf %285 : vector<16x32xf32> to vector<16x32xbf16>
    %c6_88 = arith.constant 6 : index
    %c0_89 = arith.constant 0 : index
    %c0_90 = arith.constant 0 : index
    %287 = vector.load %arg4[%c6_88, %c0_89, %c0_90] : memref<10x128x128xbf16, #tpu.memory_space<vmem>>, vector<1x32x32xbf16>
    %288 = vector.shape_cast %287 : vector<1x32x32xbf16> to vector<32x32xbf16>
    %cst_91 = arith.constant dense<0.000000e+00> : vector<16x32xf32>
    %289 = tpu.matmul %286, %288, %cst_91 {dimension_numbers = #tpu.dot_dimension_numbers<[1], [0], [0], [1], [0, 0, 1, 1], [], []>} : vector<16x32xbf16>, vector<32x32xbf16>, vector<16x32xf32> -> vector<16x32xf32>
    %c9 = arith.constant 9 : index
    %c0_92 = arith.constant 0 : index
    %290 = vector.load %arg5[%c9, %c0_92] : memref<24x128xf32, #tpu.memory_space<vmem>>, vector<1x32xf32>
    %291 = vector.broadcast %290 : vector<1x32xf32> to vector<16x32xf32>
    %292 = arith.addf %289, %291 : vector<16x32xf32>
    %293 = arith.addf %173, %292 : vector<16x32xf32>
    %c14 = arith.constant 14 : index
    %c0_93 = arith.constant 0 : index
    %294 = vector.load %arg5[%c14, %c0_93] : memref<24x128xf32, #tpu.memory_space<vmem>>, vector<1x32xf32>
    %c15 = arith.constant 15 : index
    %c0_94 = arith.constant 0 : index
    %295 = vector.load %arg5[%c15, %c0_94] : memref<24x128xf32, #tpu.memory_space<vmem>>, vector<1x32xf32>
    %cst_95 = arith.constant dense<0.000000e+00> : vector<16xf32>
    %296 = vector.multi_reduction <add>, %293, %cst_95 [1] : vector<16x32xf32> to vector<16xf32>
    %297 = vector.shape_cast %296 : vector<16xf32> to vector<16x1xf32>
    %298 = arith.mulf %293, %293 : vector<16x32xf32>
    %cst_96 = arith.constant dense<0.000000e+00> : vector<16xf32>
    %299 = vector.multi_reduction <add>, %298, %cst_96 [1] : vector<16x32xf32> to vector<16xf32>
    %300 = vector.shape_cast %299 : vector<16xf32> to vector<16x1xf32>
    %cst_97 = arith.constant 3.125000e-02 : f32
    %301 = vector.broadcast %cst_97 : f32 to vector<16x1xf32>
    %302 = arith.mulf %297, %301 : vector<16x1xf32>
    %cst_98 = arith.constant 3.125000e-02 : f32
    %303 = vector.broadcast %cst_98 : f32 to vector<16x1xf32>
    %304 = arith.mulf %300, %303 : vector<16x1xf32>
    %305 = arith.mulf %302, %302 : vector<16x1xf32>
    %306 = arith.subf %304, %305 : vector<16x1xf32>
    %307 = vector.broadcast %302 : vector<16x1xf32> to vector<16x32xf32>
    %308 = arith.subf %293, %307 : vector<16x32xf32>
    %cst_99 = arith.constant 9.99999974E-6 : f32
    %309 = vector.broadcast %cst_99 : f32 to vector<16x1xf32>
    %310 = arith.addf %306, %309 : vector<16x1xf32>
    %311 = math.rsqrt %310 : vector<16x1xf32>
    %312 = vector.broadcast %311 : vector<16x1xf32> to vector<16x32xf32>
    %313 = arith.mulf %308, %312 : vector<16x32xf32>
    %314 = vector.broadcast %294 : vector<1x32xf32> to vector<16x32xf32>
    %315 = arith.mulf %313, %314 : vector<16x32xf32>
    %316 = vector.broadcast %295 : vector<1x32xf32> to vector<16x32xf32>
    %317 = arith.addf %315, %316 : vector<16x32xf32>
    %318 = arith.truncf %317 : vector<16x32xf32> to vector<16x32xbf16>
    %c7_100 = arith.constant 7 : index
    %c0_101 = arith.constant 0 : index
    %c0_102 = arith.constant 0 : index
    %319 = vector.load %arg4[%c7_100, %c0_101, %c0_102] : memref<10x128x128xbf16, #tpu.memory_space<vmem>>, vector<1x32x64xbf16>
    %320 = vector.shape_cast %319 : vector<1x32x64xbf16> to vector<32x64xbf16>
    %cst_103 = arith.constant dense<0.000000e+00> : vector<16x64xf32>
    %321 = tpu.matmul %318, %320, %cst_103 {dimension_numbers = #tpu.dot_dimension_numbers<[1], [0], [0], [1], [0, 0, 1, 1], [], []>} : vector<16x32xbf16>, vector<32x64xbf16>, vector<16x64xf32> -> vector<16x64xf32>
    %c10 = arith.constant 10 : index
    %c0_104 = arith.constant 0 : index
    %322 = vector.load %arg5[%c10, %c0_104] : memref<24x128xf32, #tpu.memory_space<vmem>>, vector<1x64xf32>
    %323 = vector.broadcast %322 : vector<1x64xf32> to vector<16x64xf32>
    %324 = arith.addf %321, %323 : vector<16x64xf32>
    %cst_105 = arith.constant 0.000000e+00 : f32
    %325 = vector.broadcast %cst_105 : f32 to vector<16x64xf32>
    %326 = arith.maximumf %324, %325 : vector<16x64xf32>
    %327 = arith.truncf %326 : vector<16x64xf32> to vector<16x64xbf16>
    %c8_106 = arith.constant 8 : index
    %c0_107 = arith.constant 0 : index
    %c0_108 = arith.constant 0 : index
    %328 = vector.load %arg4[%c8_106, %c0_107, %c0_108] : memref<10x128x128xbf16, #tpu.memory_space<vmem>>, vector<1x64x32xbf16>
    %329 = vector.shape_cast %328 : vector<1x64x32xbf16> to vector<64x32xbf16>
    %cst_109 = arith.constant dense<0.000000e+00> : vector<16x32xf32>
    %330 = tpu.matmul %327, %329, %cst_109 {dimension_numbers = #tpu.dot_dimension_numbers<[1], [0], [0], [1], [0, 0, 1, 1], [], []>} : vector<16x64xbf16>, vector<64x32xbf16>, vector<16x32xf32> -> vector<16x32xf32>
    %331 = arith.addf %293, %330 : vector<16x32xf32>
    %c11 = arith.constant 11 : index
    %c0_110 = arith.constant 0 : index
    %332 = vector.load %arg5[%c11, %c0_110] : memref<24x128xf32, #tpu.memory_space<vmem>>, vector<1x32xf32>
    %333 = vector.broadcast %332 : vector<1x32xf32> to vector<16x32xf32>
    %334 = arith.addf %331, %333 : vector<16x32xf32>
    %c16 = arith.constant 16 : index
    %c0_111 = arith.constant 0 : index
    %335 = vector.load %arg5[%c16, %c0_111] : memref<24x128xf32, #tpu.memory_space<vmem>>, vector<1x32xf32>
    %c17 = arith.constant 17 : index
    %c0_112 = arith.constant 0 : index
    %336 = vector.load %arg5[%c17, %c0_112] : memref<24x128xf32, #tpu.memory_space<vmem>>, vector<1x32xf32>
    %cst_113 = arith.constant dense<0.000000e+00> : vector<16xf32>
    %337 = vector.multi_reduction <add>, %334, %cst_113 [1] : vector<16x32xf32> to vector<16xf32>
    %338 = vector.shape_cast %337 : vector<16xf32> to vector<16x1xf32>
    %339 = arith.mulf %334, %334 : vector<16x32xf32>
    %cst_114 = arith.constant dense<0.000000e+00> : vector<16xf32>
    %340 = vector.multi_reduction <add>, %339, %cst_114 [1] : vector<16x32xf32> to vector<16xf32>
    %341 = vector.shape_cast %340 : vector<16xf32> to vector<16x1xf32>
    %cst_115 = arith.constant 3.125000e-02 : f32
    %342 = vector.broadcast %cst_115 : f32 to vector<16x1xf32>
    %343 = arith.mulf %338, %342 : vector<16x1xf32>
    %cst_116 = arith.constant 3.125000e-02 : f32
    %344 = vector.broadcast %cst_116 : f32 to vector<16x1xf32>
    %345 = arith.mulf %341, %344 : vector<16x1xf32>
    %346 = arith.mulf %343, %343 : vector<16x1xf32>
    %347 = arith.subf %345, %346 : vector<16x1xf32>
    %348 = vector.broadcast %343 : vector<16x1xf32> to vector<16x32xf32>
    %349 = arith.subf %334, %348 : vector<16x32xf32>
    %cst_117 = arith.constant 9.99999974E-6 : f32
    %350 = vector.broadcast %cst_117 : f32 to vector<16x1xf32>
    %351 = arith.addf %347, %350 : vector<16x1xf32>
    %352 = math.rsqrt %351 : vector<16x1xf32>
    %353 = vector.broadcast %352 : vector<16x1xf32> to vector<16x32xf32>
    %354 = arith.mulf %349, %353 : vector<16x32xf32>
    %355 = vector.broadcast %335 : vector<1x32xf32> to vector<16x32xf32>
    %356 = arith.mulf %354, %355 : vector<16x32xf32>
    %357 = vector.broadcast %336 : vector<1x32xf32> to vector<16x32xf32>
    %358 = arith.addf %356, %357 : vector<16x32xf32>
    %359 = arith.truncf %358 : vector<16x32xf32> to vector<16x32xbf16>
    %c9_118 = arith.constant 9 : index
    %c0_119 = arith.constant 0 : index
    %c0_120 = arith.constant 0 : index
    %360 = vector.load %arg4[%c9_118, %c0_119, %c0_120] : memref<10x128x128xbf16, #tpu.memory_space<vmem>>, vector<1x32x128xbf16>
    %361 = vector.shape_cast %360 : vector<1x32x128xbf16> to vector<32x128xbf16>
    %cst_121 = arith.constant dense<0.000000e+00> : vector<16x128xf32>
    %362 = tpu.matmul %359, %361, %cst_121 {dimension_numbers = #tpu.dot_dimension_numbers<[1], [0], [0], [1], [0, 0, 1, 1], [], []>} : vector<16x32xbf16>, vector<32x128xbf16>, vector<16x128xf32> -> vector<16x128xf32>
    %c18 = arith.constant 18 : index
    %c0_122 = arith.constant 0 : index
    %363 = vector.load %arg5[%c18, %c0_122] : memref<24x128xf32, #tpu.memory_space<vmem>>, vector<1x128xf32>
    %364 = vector.broadcast %363 : vector<1x128xf32> to vector<16x128xf32>
    %365 = arith.addf %362, %364 : vector<16x128xf32>
    %cst_123 = arith.constant dense<0xFF800000> : vector<16xf32>
    %366 = vector.multi_reduction <maximumf>, %365, %cst_123 [1] : vector<16x128xf32> to vector<16xf32>
    %367 = vector.shape_cast %366 : vector<16xf32> to vector<16x1xf32>
    %368 = vector.broadcast %367 : vector<16x1xf32> to vector<16x128xf32>
    %369 = arith.subf %365, %368 : vector<16x128xf32>
    %370 = math.exp %369 : vector<16x128xf32>
    %cst_124 = arith.constant dense<0.000000e+00> : vector<16xf32>
    %371 = vector.multi_reduction <add>, %370, %cst_124 [1] : vector<16x128xf32> to vector<16xf32>
    %372 = vector.shape_cast %371 : vector<16xf32> to vector<16x1xf32>
    %373 = math.log %372 : vector<16x1xf32>
    %374 = vector.broadcast %373 : vector<16x1xf32> to vector<16x128xf32>
    %375 = arith.subf %369, %374 : vector<16x128xf32>
    %c0_125 = arith.constant 0 : index
    %c0_126 = arith.constant 0 : index
    %376 = vector.load %arg6[%c0_125, %c0_126] : memref<16x128xf32, #tpu.memory_space<vmem>>, vector<16x128xf32>
    tpu.vector_store %arg6[%c0_125, %c0_126], %375 {strides = array<i32>} : memref<16x128xf32, #tpu.memory_space<vmem>>, vector<16x128xf32>,
    return
  }
  func.func @transform_0(%arg0: i32) -> (i32, i32) {
    %c0_i32 = arith.constant 0 : i32
    %c0_i32_0 = arith.constant 0 : i32
    %c0_i32_1 = arith.constant 0 : i32
    return %c0_i32, %c0_i32_0 : i32, i32
  }
  func.func @transform_1(%arg0: i32) -> (i32, i32) {
    %c0_i32 = arith.constant 0 : i32
    %c0_i32_0 = arith.constant 0 : i32
    %c0_i32_1 = arith.constant 0 : i32
    return %c0_i32, %c0_i32_0 : i32, i32
  }
  func.func @transform_2(%arg0: i32) -> (i32, i32) {
    %c0_i32 = arith.constant 0 : i32
    %c0_i32_0 = arith.constant 0 : i32
    %c0_i32_1 = arith.constant 0 : i32
    return %c0_i32, %c0_i32_0 : i32, i32
  }
  func.func @transform_3(%arg0: i32) -> (i32, i32, i32) {
    %c0_i32 = arith.constant 0 : i32
    %c0_i32_0 = arith.constant 0 : i32
    %c0_i32_1 = arith.constant 0 : i32
    %c0_i32_2 = arith.constant 0 : i32
    return %c0_i32, %c0_i32_0, %c0_i32_1 : i32, i32, i32
  }
  func.func @transform_4(%arg0: i32) -> (i32, i32) {
    %c0_i32 = arith.constant 0 : i32
    %c0_i32_0 = arith.constant 0 : i32
    %c0_i32_1 = arith.constant 0 : i32
    return %c0_i32, %c0_i32_0 : i32, i32
  }
  func.func @transform_5(%arg0: i32) -> (i32, i32) {
    %c0_i32 = arith.constant 0 : i32
    %c0_i32_0 = arith.constant 0 : i32
    %c0_i32_1 = arith.constant 0 : i32
    return %c0_i32, %c0_i32_0 : i32, i32
  }
}

</mosaic_0001>

<llo_original>
// kernel: full_transformer_forward.1
$region0: #{full_transformer_forward.1}
  #allocation0 [shape = 'u32[]', space=smem, size = 0x4, offset = 0x4, fixed_abs, tag = 'smem constant byte address 0x4 - core index']
  #allocation1 [shape = 'u32[72,128]{1,0:T(1,128)}', space=vmem, size = 0x9000, scoped, tag = 'internal scratch']
  %s0 = inlined_call_operand.vmem [shape: s32[16,1], index: 0, kind: input, shape index: {}]
  %s1 = inlined_call_operand.vmem [shape: f32[16,16], index: 1, kind: input, shape index: {}]
  %s2 = inlined_call_operand.vmem [shape: f32[16,32], index: 2, kind: input, shape index: {}]
  %s3 = inlined_call_operand.hbm [shape: bf16[10,128,128], index: 3, kind: input, shape index: {}]
  %s4 = inlined_call_operand.vmem [shape: f32[24,128], index: 4, kind: input, shape index: {}]
  %s5 = inlined_call_operand.hbm [shape: f32[16,128], index: 5, kind: output, shape index: {}]
  %s6 = sld [smem:[#allocation0]]
  $region34: #{full_transformer_forward.1} parent=0
    _
  %s8 = ssub.s32 1, %s6
  %s9 = scalar_select 0, %s8, %s6
  $region1: #{full_transformer_forward.1} parent=0
    #allocation2 [shape = 'u8[327680]{0}', space=vmem, size = 0x50000, scoped, tag = 'input window, operand 3, single buffered']
    #allocation3 [shape = 's32[1]{0}', space=sflag, size = 0x4, scoped, tag = 'scoped memory for full_transformer_forward.1']
    #allocation4 [shape = 's32[1]{0}', space=sflag, size = 0x4, scoped, tag = 'scoped memory for full_transformer_forward.1']
    #allocation5 [shape = 'u8[8192]{0}', space=vmem, size = 0x2000, scoped, tag = 'output window, operand 0, single buffered']
    %10 = vsyncpa [#allocation3], 0
    %11 = vsyncpa [#allocation4], 0
    // Predicated region
    $region2: #{full_transformer_forward.1} parent=1 // pred_check
      _
    $region3: #{full_transformer_forward.1} parent=1 // pred_check_branch
      %13 = sbr.rel (0) target = $region5
    $region4: #{full_transformer_forward.1} parent=1 // pred_region
      _
    $region5: #{full_transformer_forward.1} parent=1 // pred_fallthru
      _
    // Predicated region
    $region6: #{full_transformer_forward.1} parent=1 // pred_check
      _
    $region7: #{full_transformer_forward.1} parent=1 // pred_check_branch
      %15 = sbr.rel (0) target = $region9
    $region8: #{full_transformer_forward.1} parent=1 // pred_region
      _
    $region9: #{full_transformer_forward.1} parent=1 // pred_fallthru
      _
    // Predicated region
    $region10: #{full_transformer_forward.1} parent=1 // pred_check
      _
    $region11: #{full_transformer_forward.1} parent=1 // pred_check_branch
      %17 = sbr.rel (0) target = $region13
    $region12: #{full_transformer_forward.1} parent=1 // pred_region
      _
    $region13: #{full_transformer_forward.1} parent=1 // pred_fallthru
      _
    // Predicated region
    $region14: #{full_transformer_forward.1} parent=1 // pred_check
      _
    $region15: #{full_transformer_forward.1} parent=1 // pred_check_branch
      %19 = sbr.rel (0) target = $region17
    $region16: #{full_transformer_forward.1} parent=1 // pred_region
      %21 = vsyncadd [#allocation3], 0
      %s22 = sshll.u32 %s3, 4
      %s23 = int_to_ptr.hbm [resolvable:$true] %s22
      %s24 = sshll.u32 [#allocation2], 4
      %s25 = int_to_ptr.vmem [resolvable:$true] %s24
      %30 = dma.hbm_to_vmem [thread:$0]  %s23, 10240, %s25, [#allocation3], 64, 64, 4
    $region17: #{full_transformer_forward.1} parent=1 // pred_fallthru
      _
    // Predicated region
    $region18: #{full_transformer_forward.1} parent=1 // pred_check
      _
    $region19: #{full_transformer_forward.1} parent=1 // pred_check_branch
      %32 = sbr.rel (0) target = $region21
    $region20: #{full_transformer_forward.1} parent=1 // pred_region
      _
    $region21: #{full_transformer_forward.1} parent=1 // pred_fallthru
      _
    // Predicated region
    $region22: #{full_transformer_forward.1} parent=1 // pred_check
      _
    $region23: #{full_transformer_forward.1} parent=1 // pred_check_branch
      %34 = sbr.rel (0) target = $region25
    $region24: #{full_transformer_forward.1} parent=1 // pred_region
      %36 = dma.done [#allocation3], 10240
    $region25: #{full_transformer_forward.1} parent=1 // pred_fallthru
      _
    %v38 = vld [vmem:[%s0] sm:$0xff]
    %v39 = vld [vmem:[%s0 + $0x8] sm:$0xff]
    %v40 = vlaneseq
    %v41 = vand.u32 %v40, 127
    %42 = vset.pattern.permute.xlu0 0
    %43 = vperm.xlu0 %42, %v38
    %v44 = vpop.permute.xlu0 %43
    %45 = vset.pattern.permute.xlu0 0
    %46 = vperm.xlu0 %45, %v39
    %v47 = vpop.permute.xlu0 %46
    %vm48 = vcmp.eq.s32.totalorder %v41, %v44
    %vm49 = vcmp.eq.s32.totalorder %v41, %v47
    %v50 = vsel %vm48, 1, 0
    %v51 = vsel %vm49, 1, 0
    %v52 = vcvt.s32.f32 %v50
    %v53 = vcvt.s32.f32 %v51
    %v54 = vpack.c.bf16 %v53, %v52
    %v55 = vld [vmem:[#allocation2] sm:$0xf]
    %v56 = vld [vmem:[#allocation2 + $0x4] sm:$0xf]
    %v57 = vld [vmem:[#allocation2 + $0x8] sm:$0xf]
    %v58 = vld [vmem:[#allocation2 + $0xc] sm:$0xf]
    %v59 = vld [vmem:[#allocation2 + $0x10] sm:$0xf]
    %v60 = vld [vmem:[#allocation2 + $0x14] sm:$0xf]
    %v61 = vld [vmem:[#allocation2 + $0x18] sm:$0xf]
    %v62 = vld [vmem:[#allocation2 + $0x1c] sm:$0xf]
    %v63 = vld [vmem:[#allocation2 + $0x20] sm:$0xf]
    %v64 = vld [vmem:[#allocation2 + $0x24] sm:$0xf]
    %v65 = vld [vmem:[#allocation2 + $0x28] sm:$0xf]
    %v66 = vld [vmem:[#allocation2 + $0x2c] sm:$0xf]
    %v67 = vld [vmem:[#allocation2 + $0x30] sm:$0xf]
    %v68 = vld [vmem:[#allocation2 + $0x34] sm:$0xf]
    %v69 = vld [vmem:[#allocation2 + $0x38] sm:$0xf]
    %v70 = vld [vmem:[#allocation2 + $0x3c] sm:$0xf]
    %v71 = vld [vmem:[%s2] sm:$0xff]
    %v72 = vld [vmem:[%s2 + $0x8] sm:$0xff]
    %v89 = vunpack.c.l.b16 %v55
    %v90 = vunpack.c.l.b16 %v56
    %v91 = vunpack.c.l.b16 %v57
    %v92 = vunpack.c.l.b16 %v58
    %v93 = vunpack.c.l.b16 %v59
    %v94 = vunpack.c.l.b16 %v60
    %v95 = vunpack.c.l.b16 %v61
    %v96 = vunpack.c.l.b16 %v62
    %v97 = vunpack.c.l.b16 %v63
    %v98 = vunpack.c.l.b16 %v64
    %v99 = vunpack.c.l.b16 %v65
    %v100 = vunpack.c.l.b16 %v66
    %v101 = vunpack.c.l.b16 %v67
    %v102 = vunpack.c.l.b16 %v68
    %v103 = vunpack.c.l.b16 %v69
    %v104 = vunpack.c.l.b16 %v70
    %v105 = vpack.c.b16 %v90, %v89
    %v106 = vpack.c.b16 %v92, %v91
    %v107 = vpack.c.b16 %v94, %v93
    %v108 = vpack.c.b16 %v96, %v95
    %v109 = vpack.c.b16 %v98, %v97
    %v110 = vpack.c.b16 %v100, %v99
    %v111 = vpack.c.b16 %v102, %v101
    %v112 = vpack.c.b16 %v104, %v103
    %121 = vmatpush.bf16.msra.mxu0 %v112
    %122 = vmatpush.bf16.msra.mxu0 %v111
    %123 = vmatpush.bf16.msra.mxu0 %v110
    %124 = vmatpush.bf16.msra.mxu0 %v109
    %125 = vmatpush.bf16.msra.mxu0 %v108
    %126 = vmatpush.bf16.msra.mxu0 %v107
    %127 = vmatpush.bf16.msra.mxu0 %v106
    %128 = vmatpush.bf16.msra.mxu0 %v105
    %129 = vmatmul.bf16.gmra.mxu0 %v54
    %v130 = vpop.f32.mrf.mxu0
    %v131 = vadd.f32 %v71, %v130
    %v132 = vpop.f32.mrf.mxu0
    %v133 = vadd.f32 %v72, %v132
    %134 = vdwg.mxu0
    %v135 = vld [vmem:[%s1] sm:$0xff]
    %v136 = vld [vmem:[%s1 + $0x8] sm:$0xff]
    %v137 = vld [vmem:[%s4 + $0x4] sm:$0x1]
    %v138 = vld [vmem:[%s4 + $0x5] sm:$0x1]
    %vm139 = vcmask 261120
    %v140 = vsel %vm139, %v131, 0.0
    %141 = vadd.xlane.f32.xlu0 %v140
    %v142 = vpop.xlane.xlu0 %141
    %v143 = vsel %vm139, %v133, 0.0
    %144 = vadd.xlane.f32.xlu0 %v143
    %v145 = vpop.xlane.xlu0 %144
    %v146 = vmul.f32 %v131, %v131
    %v147 = vmul.f32 %v133, %v133
    %v148 = vsel %vm139, %v146, 0.0
    %149 = vadd.xlane.f32.xlu0 %v148
    %v150 = vpop.xlane.xlu0 %149
    %v151 = vsel %vm139, %v147, 0.0
    %152 = vadd.xlane.f32.xlu0 %v151
    %v153 = vpop.xlane.xlu0 %152
    %v154 = vmul.f32 %v142, 0.03125
    %v155 = vmul.f32 %v145, 0.03125
    %v156 = vmul.f32 %v150, 0.03125
    %v157 = vmul.f32 %v153, 0.03125
    %v158 = vmul.f32 %v154, %v154
    %v159 = vmul.f32 %v155, %v155
    %v160 = vsub.f32 %v156, %v158
    %v161 = vsub.f32 %v157, %v159
    %v162 = vsub.f32 %v131, %v154
    %v163 = vsub.f32 %v133, %v155
    %v164 = vadd.f32 %v160, 1e-05
    %v165 = vadd.f32 %v161, 1e-05
    %v166 = vrsqrt.pop %v164
    %v167 = vmul.f32 %v166, %v164
    %v168 = vmul.f32 %v167, %v166
    %v169 = vmul.f32 0.5, %v168
    %v170 = vsub.f32 1.5, %v169
    %v171 = vmul.f32 %v166, %v170
    %vm172 = vweird.f32 %v164
    %vm173 = vweird.f32 %v166
    %vm174 = vmor %vm172, %vm173
    %v175 = vsel %vm174, %v166, %v171
    %v176 = vrsqrt.pop %v165
    %v177 = vmul.f32 %v176, %v165
    %v178 = vmul.f32 %v177, %v176
    %v179 = vmul.f32 0.5, %v178
    %v180 = vsub.f32 1.5, %v179
    %v181 = vmul.f32 %v176, %v180
    %vm182 = vweird.f32 %v165
    %vm183 = vweird.f32 %v176
    %vm184 = vmor %vm182, %vm183
    %v185 = vsel %vm184, %v176, %v181
    %v186 = vmul.f32 %v162, %v175
    %v187 = vmul.f32 %v163, %v185
    %v188 = vperm.slane %v137, 0
    %v189 = vmul.f32 %v186, %v188
    %v190 = vmul.f32 %v187, %v188
    %v191 = vperm.slane %v138, 0
    %v192 = vadd.f32 %v189, %v191
    %v193 = vadd.f32 %v190, %v191
    %v194 = vpack.c.bf16 %v193, %v192
    %s195 = scalar_lea.vmem [#allocation2], 64
    %v196 = vld [vmem:[%s195] sm:$0xf]
    %v197 = vld [vmem:[%s195 + $0x4] sm:$0xf]
    %v198 = vld [vmem:[%s195 + $0x8] sm:$0xf]
    %v199 = vld [vmem:[%s195 + $0xc] sm:$0xf]
    %v200 = vld [vmem:[%s4] sm:$0x1]
    %v201 = vperm.slane %v200, 0
    %v206 = vunpack.c.l.b16 %v196
    %v207 = vunpack.c.l.b16 %v197
    %v208 = vunpack.c.l.b16 %v198
    %v209 = vunpack.c.l.b16 %v199
    %v210 = vpack.c.b16 %v207, %v206
    %v211 = vpack.c.b16 %v209, %v208
    %v215 = vsel %vm139, %v194, 0
    %217 = vmatpush.bf16.msra.mxu0 0
    %218 = vmatpush.bf16.msra.mxu0 0
    %219 = vmatpush.bf16.msra.mxu0 0
    %220 = vmatpush.bf16.msra.mxu0 0
    %221 = vmatpush.bf16.msra.mxu0 0
    %222 = vmatpush.bf16.msra.mxu0 0
    %223 = vmatpush.bf16.msra.mxu0 %v211
    %224 = vmatpush.bf16.msra.mxu0 %v210
    %225 = vmatmul.bf16.gmra.mxu0 %v215
    %v226 = vpop.f32.mrf.mxu0
    %v227 = vadd.f32 %v201, %v226
    %v228 = vpop.f32.mrf.mxu0
    %v229 = vadd.f32 %v201, %v228
    %230 = vdwg.mxu0
    %v231 = vpack.c.bf16 %v229, %v227
    %233 = vrot.lane.b32.xlu0 %v231, 96
    %v234 = vpop.permute.xlu0 %233
    %vm235 = vcmask 64512
    %v237 = vsel %vm235, %v231, 0
    %v240 = vsel %vm235, %v234, 0
    %242 = vmatpush.bf16.xpose.msra.mxu0 0
    %243 = vmatpush.bf16.xpose.msra.mxu0 0
    %244 = vmatpush.bf16.xpose.msra.mxu0 0
    %245 = vmatpush.bf16.xpose.msra.mxu0 0
    %246 = vmatpush.bf16.xpose.msra.mxu0 0
    %247 = vmatpush.bf16.xpose.msra.mxu0 0
    %248 = vmatpush.bf16.xpose.msra.mxu0 0
    %249 = vmatpush.bf16.xpose.msra.mxu0 %v240
    %250 = vmatmul.bf16.gmra.mxu0 %v237
    %v251 = vpop.f32.mrf.mxu0
    %v252 = vadd.f32 %v135, %v251
    %v253 = vpop.f32.mrf.mxu0
    %v254 = vadd.f32 %v136, %v253
    %255 = vdwg.mxu0
    %vm256 = vcmask 130048
    %v257 = vsel %vm256, %v252, -inf
    %258 = vmax.xlane.f32.xlu0 %v257
    %v259 = vpop.xlane.xlu0 %258
    %v260 = vsel %vm256, %v254, -inf
    %261 = vmax.xlane.f32.xlu0 %v260
    %v262 = vpop.xlane.xlu0 %261
    %v263 = vsub.f32 %v252, %v259
    %v264 = vsub.f32 %v254, %v262
    %v265 = vmul.f32 %v263, 1.442695
    %v266 = vpow.pop %v265
    %v267 = vmul.f32 %v264, 1.442695
    %v268 = vpow.pop %v267
    %v269 = vsel %vm256, %v266, 0.0
    %270 = vadd.xlane.f32.xlu0 %v269
    %v271 = vpop.xlane.xlu0 %270
    %v272 = vsel %vm256, %v268, 0.0
    %273 = vadd.xlane.f32.xlu0 %v272
    %v274 = vpop.xlane.xlu0 %273
    %v275 = vrcp.pop %v271
    %v276 = vrcp.pop %v274
    %v277 = vmul.f32 %v266, %v275
    %v278 = vmul.f32 %v268, %v276
    %v279 = vpack.c.bf16 %v278, %v277
    %280 = vrot.lane.b32.xlu0 %v231, 64
    %v281 = vpop.permute.xlu0 %280
    %v284 = vsel %vm256, %v279, 0
    %286 = vmatpush.bf16.msra.mxu0 0
    %287 = vmatpush.bf16.msra.mxu0 0
    %288 = vmatpush.bf16.msra.mxu0 0
    %289 = vmatpush.bf16.msra.mxu0 0
    %290 = vmatpush.bf16.msra.mxu0 0
    %291 = vmatpush.bf16.msra.mxu0 0
    %292 = vmatpush.bf16.msra.mxu0 0
    %293 = vmatpush.bf16.msra.mxu0 %v281
    %294 = vmatmul.bf16.gmra.mxu0 %v284
    %v295 = vpop.f32.mrf.mxu0
    %v296 = vadd.f32 0.0, %v295
    %v297 = vpop.f32.mrf.mxu0
    %v298 = vadd.f32 0.0, %v297
    %299 = vdwg.mxu0
    %300 = vrot.lane.b32.xlu0 %v231, 120
    %v301 = vpop.permute.xlu0 %300
    %302 = vrot.lane.b32.xlu0 %v231, 88
    %v303 = vpop.permute.xlu0 %302
    %v305 = vsel %vm235, %v301, 0
    %v308 = vsel %vm235, %v303, 0
    %310 = vmatpush.bf16.xpose.msra.mxu0 0
    %311 = vmatpush.bf16.xpose.msra.mxu0 0
    %312 = vmatpush.bf16.xpose.msra.mxu0 0
    %313 = vmatpush.bf16.xpose.msra.mxu0 0
    %314 = vmatpush.bf16.xpose.msra.mxu0 0
    %315 = vmatpush.bf16.xpose.msra.mxu0 0
    %316 = vmatpush.bf16.xpose.msra.mxu0 0
    %317 = vmatpush.bf16.xpose.msra.mxu0 %v308
    %318 = vmatmul.bf16.gmra.mxu0 %v305
    %v319 = vpop.f32.mrf.mxu0
    %v320 = vadd.f32 %v135, %v319
    %v321 = vpop.f32.mrf.mxu0
    %v322 = vadd.f32 %v136, %v321
    %323 = vdwg.mxu0
    %v324 = vsel %vm256, %v320, -inf
    %325 = vmax.xlane.f32.xlu0 %v324
    %v326 = vpop.xlane.xlu0 %325
    %v327 = vsel %vm256, %v322, -inf
    %328 = vmax.xlane.f32.xlu0 %v327
    %v329 = vpop.xlane.xlu0 %328
    %v330 = vsub.f32 %v320, %v326
    %v331 = vsub.f32 %v322, %v329
    %v332 = vmul.f32 %v330, 1.442695
    %v333 = vpow.pop %v332
    %v334 = vmul.f32 %v331, 1.442695
    %v335 = vpow.pop %v334
    %v336 = vsel %vm256, %v333, 0.0
    %337 = vadd.xlane.f32.xlu0 %v336
    %v338 = vpop.xlane.xlu0 %337
    %v339 = vsel %vm256, %v335, 0.0
    %340 = vadd.xlane.f32.xlu0 %v339
    %v341 = vpop.xlane.xlu0 %340
    %v342 = vrcp.pop %v338
    %v343 = vrcp.pop %v341
    %v344 = vmul.f32 %v333, %v342
    %v345 = vmul.f32 %v335, %v343
    %v346 = vpack.c.bf16 %v345, %v344
    %347 = vrot.lane.b32.xlu0 %v231, 56
    %v348 = vpop.permute.xlu0 %347
    %v351 = vsel %vm256, %v346, 0
    %353 = vmatpush.bf16.msra.mxu0 0
    %354 = vmatpush.bf16.msra.mxu0 0
    %355 = vmatpush.bf16.msra.mxu0 0
    %356 = vmatpush.bf16.msra.mxu0 0
    %357 = vmatpush.bf16.msra.mxu0 0
    %358 = vmatpush.bf16.msra.mxu0 0
    %359 = vmatpush.bf16.msra.mxu0 0
    %360 = vmatpush.bf16.msra.mxu0 %v348
    %361 = vmatmul.bf16.gmra.mxu0 %v351
    %v362 = vpop.f32.mrf.mxu0
    %v363 = vadd.f32 0.0, %v362
    %v364 = vpop.f32.mrf.mxu0
    %v365 = vadd.f32 0.0, %v364
    %366 = vdwg.mxu0
    %367 = vrot.lane.b32.xlu0 %v231, 112
    %v368 = vpop.permute.xlu0 %367
    %369 = vrot.lane.b32.xlu0 %v231, 80
    %v370 = vpop.permute.xlu0 %369
    %v372 = vsel %vm235, %v368, 0
    %v375 = vsel %vm235, %v370, 0
    %377 = vmatpush.bf16.xpose.msra.mxu0 0
    %378 = vmatpush.bf16.xpose.msra.mxu0 0
    %379 = vmatpush.bf16.xpose.msra.mxu0 0
    %380 = vmatpush.bf16.xpose.msra.mxu0 0
    %381 = vmatpush.bf16.xpose.msra.mxu0 0
    %382 = vmatpush.bf16.xpose.msra.mxu0 0
    %383 = vmatpush.bf16.xpose.msra.mxu0 0
    %384 = vmatpush.bf16.xpose.msra.mxu0 %v375
    %385 = vmatmul.bf16.gmra.mxu0 %v372
    %v386 = vpop.f32.mrf.mxu0
    %v387 = vadd.f32 %v135, %v386
    %v388 = vpop.f32.mrf.mxu0
    %v389 = vadd.f32 %v136, %v388
    %390 = vdwg.mxu0
    %v391 = vsel %vm256, %v387, -inf
    %392 = vmax.xlane.f32.xlu0 %v391
    %v393 = vpop.xlane.xlu0 %392
    %v394 = vsel %vm256, %v389, -inf
    %395 = vmax.xlane.f32.xlu0 %v394
    %v396 = vpop.xlane.xlu0 %395
    %v397 = vsub.f32 %v387, %v393
    %v398 = vsub.f32 %v389, %v396
    %v399 = vmul.f32 %v397, 1.442695
    %v400 = vpow.pop %v399
    %v401 = vmul.f32 %v398, 1.442695
    %v402 = vpow.pop %v401
    %v403 = vsel %vm256, %v400, 0.0
    %404 = vadd.xlane.f32.xlu0 %v403
    %v405 = vpop.xlane.xlu0 %404
    %v406 = vsel %vm256, %v402, 0.0
    %407 = vadd.xlane.f32.xlu0 %v406
    %v408 = vpop.xlane.xlu0 %407
    %v409 = vrcp.pop %v405
    %v410 = vrcp.pop %v408
    %v411 = vmul.f32 %v400, %v409
    %v412 = vmul.f32 %v402, %v410
    %v413 = vpack.c.bf16 %v412, %v411
    %414 = vrot.lane.b32.xlu0 %v231, 48
    %v415 = vpop.permute.xlu0 %414
    %v418 = vsel %vm256, %v413, 0
    %420 = vmatpush.bf16.msra.mxu0 0
    %421 = vmatpush.bf16.msra.mxu0 0
    %422 = vmatpush.bf16.msra.mxu0 0
    %423 = vmatpush.bf16.msra.mxu0 0
    %424 = vmatpush.bf16.msra.mxu0 0
    %425 = vmatpush.bf16.msra.mxu0 0
    %426 = vmatpush.bf16.msra.mxu0 0
    %427 = vmatpush.bf16.msra.mxu0 %v415
    %428 = vmatmul.bf16.gmra.mxu0 %v418
    %v429 = vpop.f32.mrf.mxu0
    %v430 = vadd.f32 0.0, %v429
    %v431 = vpop.f32.mrf.mxu0
    %v432 = vadd.f32 0.0, %v431
    %433 = vdwg.mxu0
    %434 = vrot.lane.b32.xlu0 %v231, 104
    %v435 = vpop.permute.xlu0 %434
    %436 = vrot.lane.b32.xlu0 %v231, 72
    %v437 = vpop.permute.xlu0 %436
    %v439 = vsel %vm235, %v435, 0
    %v442 = vsel %vm235, %v437, 0
    %444 = vmatpush.bf16.xpose.msra.mxu0 0
    %445 = vmatpush.bf16.xpose.msra.mxu0 0
    %446 = vmatpush.bf16.xpose.msra.mxu0 0
    %447 = vmatpush.bf16.xpose.msra.mxu0 0
    %448 = vmatpush.bf16.xpose.msra.mxu0 0
    %449 = vmatpush.bf16.xpose.msra.mxu0 0
    %450 = vmatpush.bf16.xpose.msra.mxu0 0
    %451 = vmatpush.bf16.xpose.msra.mxu0 %v442
    %452 = vmatmul.bf16.gmra.mxu0 %v439
    %v453 = vpop.f32.mrf.mxu0
    %v454 = vadd.f32 %v135, %v453
    %v455 = vpop.f32.mrf.mxu0
    %v456 = vadd.f32 %v136, %v455
    %457 = vdwg.mxu0
    %v458 = vsel %vm256, %v454, -inf
    %459 = vmax.xlane.f32.xlu0 %v458
    %v460 = vpop.xlane.xlu0 %459
    %v461 = vsel %vm256, %v456, -inf
    %462 = vmax.xlane.f32.xlu0 %v461
    %v463 = vpop.xlane.xlu0 %462
    %v464 = vsub.f32 %v454, %v460
    %v465 = vsub.f32 %v456, %v463
    %v466 = vmul.f32 %v464, 1.442695
    %v467 = vpow.pop %v466
    %v468 = vmul.f32 %v465, 1.442695
    %v469 = vpow.pop %v468
    %v470 = vsel %vm256, %v467, 0.0
    %471 = vadd.xlane.f32.xlu0 %v470
    %v472 = vpop.xlane.xlu0 %471
    %v473 = vsel %vm256, %v469, 0.0
    %474 = vadd.xlane.f32.xlu0 %v473
    %v475 = vpop.xlane.xlu0 %474
    %v476 = vrcp.pop %v472
    %v477 = vrcp.pop %v475
    %v478 = vmul.f32 %v467, %v476
    %v479 = vmul.f32 %v469, %v477
    %v480 = vpack.c.bf16 %v479, %v478
    %481 = vrot.lane.b32.xlu0 %v231, 40
    %v482 = vpop.permute.xlu0 %481
    %v485 = vsel %vm256, %v480, 0
    %487 = vmatpush.bf16.msra.mxu0 0
    %488 = vmatpush.bf16.msra.mxu0 0
    %489 = vmatpush.bf16.msra.mxu0 0
    %490 = vmatpush.bf16.msra.mxu0 0
    %491 = vmatpush.bf16.msra.mxu0 0
    %492 = vmatpush.bf16.msra.mxu0 0
    %493 = vmatpush.bf16.msra.mxu0 0
    %494 = vmatpush.bf16.msra.mxu0 %v482
    %495 = vmatmul.bf16.gmra.mxu0 %v485
    %v496 = vpop.f32.mrf.mxu0
    %v497 = vadd.f32 0.0, %v496
    %v498 = vpop.f32.mrf.mxu0
    %v499 = vadd.f32 0.0, %v498
    %500 = vdwg.mxu0
    %503 = vrot.lane.b32.xlu0 %v363, 8
    %v504 = vpop.permute.xlu0 %503
    %505 = vrot.lane.b32.xlu0 %v365, 8
    %v506 = vpop.permute.xlu0 %505
    %511 = vrot.lane.b32.xlu0 %v430, 16
    %v512 = vpop.permute.xlu0 %511
    %513 = vrot.lane.b32.xlu0 %v432, 16
    %v514 = vpop.permute.xlu0 %513
    %519 = vrot.lane.b32.xlu0 %v497, 24
    %v520 = vpop.permute.xlu0 %519
    %521 = vrot.lane.b32.xlu0 %v499, 24
    %v522 = vpop.permute.xlu0 %521
    %v525 = vsel %vm235, %v296, %v504
    %v526 = vsel %vm235, %v298, %v506
    %v527 = vsel %vm256, %v525, %v512
    %v528 = vsel %vm256, %v526, %v514
    %vm529 = vcmask 195584
    %v530 = vsel %vm529, %v527, %v520
    %v531 = vsel %vm529, %v528, %v522
    %v532 = vpack.c.bf16 %v531, %v530
    %s533 = scalar_lea.vmem [#allocation2], 128
    %v534 = vld [vmem:[%s533] sm:$0xf]
    %v535 = vld [vmem:[%s533 + $0x4] sm:$0xf]
    %v536 = vld [vmem:[%s533 + $0x8] sm:$0xf]
    %v537 = vld [vmem:[%s533 + $0xc] sm:$0xf]
    %v538 = vld [vmem:[%s4 + $0x1] sm:$0x1]
    %v539 = vperm.slane %v538, 0
    %v544 = vunpack.c.l.b16 %v534
    %v545 = vunpack.c.l.b16 %v535
    %v546 = vunpack.c.l.b16 %v536
    %v547 = vunpack.c.l.b16 %v537
    %v548 = vpack.c.b16 %v545, %v544
    %v549 = vpack.c.b16 %v547, %v546
    %v553 = vsel %vm139, %v532, 0
    %555 = vmatpush.bf16.msra.mxu0 0
    %556 = vmatpush.bf16.msra.mxu0 0
    %557 = vmatpush.bf16.msra.mxu0 0
    %558 = vmatpush.bf16.msra.mxu0 0
    %559 = vmatpush.bf16.msra.mxu0 0
    %560 = vmatpush.bf16.msra.mxu0 0
    %561 = vmatpush.bf16.msra.mxu0 %v549
    %562 = vmatpush.bf16.msra.mxu0 %v548
    %563 = vmatmul.bf16.gmra.mxu0 %v553
    %v564 = vpop.f32.mrf.mxu0
    %v565 = vadd.f32 %v539, %v564
    %v566 = vpop.f32.mrf.mxu0
    %v567 = vadd.f32 %v539, %v566
    %568 = vdwg.mxu0
    %v569 = vadd.f32 %v131, %v565
    %v570 = vadd.f32 %v133, %v567
    %v571 = vld [vmem:[%s4 + $0x6] sm:$0x1]
    %v572 = vld [vmem:[%s4 + $0x7] sm:$0x1]
    %v573 = vsel %vm139, %v569, 0.0
    %574 = vadd.xlane.f32.xlu0 %v573
    %v575 = vpop.xlane.xlu0 %574
    %v576 = vsel %vm139, %v570, 0.0
    %577 = vadd.xlane.f32.xlu0 %v576
    %v578 = vpop.xlane.xlu0 %577
    %v579 = vmul.f32 %v569, %v569
    %v580 = vmul.f32 %v570, %v570
    %v581 = vsel %vm139, %v579, 0.0
    %582 = vadd.xlane.f32.xlu0 %v581
    %v583 = vpop.xlane.xlu0 %582
    %v584 = vsel %vm139, %v580, 0.0
    %585 = vadd.xlane.f32.xlu0 %v584
    %v586 = vpop.xlane.xlu0 %585
    %v587 = vmul.f32 %v575, 0.03125
    %v588 = vmul.f32 %v578, 0.03125
    %v589 = vmul.f32 %v583, 0.03125
    %v590 = vmul.f32 %v586, 0.03125
    %v591 = vmul.f32 %v587, %v587
    %v592 = vmul.f32 %v588, %v588
    %v593 = vsub.f32 %v589, %v591
    %v594 = vsub.f32 %v590, %v592
    %v595 = vsub.f32 %v569, %v587
    %v596 = vsub.f32 %v570, %v588
    %v597 = vadd.f32 %v593, 1e-05
    %v598 = vadd.f32 %v594, 1e-05
    %v599 = vrsqrt.pop %v597
    %v600 = vmul.f32 %v599, %v597
    %v601 = vmul.f32 %v600, %v599
    %v602 = vmul.f32 0.5, %v601
    %v603 = vsub.f32 1.5, %v602
    %v604 = vmul.f32 %v599, %v603
    %vm605 = vweird.f32 %v597
    %vm606 = vweird.f32 %v599
    %vm607 = vmor %vm605, %vm606
    %v608 = vsel %vm607, %v599, %v604
    %v609 = vrsqrt.pop %v598
    %v610 = vmul.f32 %v609, %v598
    %v611 = vmul.f32 %v610, %v609
    %v612 = vmul.f32 0.5, %v611
    %v613 = vsub.f32 1.5, %v612
    %v614 = vmul.f32 %v609, %v613
    %vm615 = vweird.f32 %v598
    %vm616 = vweird.f32 %v609
    %vm617 = vmor %vm615, %vm616
    %v618 = vsel %vm617, %v609, %v614
    %v619 = vmul.f32 %v595, %v608
    %v620 = vmul.f32 %v596, %v618
    %v621 = vperm.slane %v571, 0
    %v622 = vmul.f32 %v619, %v621
    %v623 = vmul.f32 %v620, %v621
    %v624 = vperm.slane %v572, 0
    %v625 = vadd.f32 %v622, %v624
    %v626 = vadd.f32 %v623, %v624
    %v627 = vpack.c.bf16 %v626, %v625
    %s628 = scalar_lea.vmem [#allocation2], 192
    %v629 = vld [vmem:[%s628] sm:$0xf]
    %v630 = vld [vmem:[%s628 + $0x4] sm:$0xf]
    %v631 = vld [vmem:[%s628 + $0x8] sm:$0xf]
    %v632 = vld [vmem:[%s628 + $0xc] sm:$0xf]
    %v633 = vld [vmem:[%s4 + $0x2] sm:$0x1]
    %v634 = vperm.slane %v633, 0
    %v639 = vunpack.c.l.b16 %v629
    %v640 = vunpack.c.l.b16 %v630
    %v641 = vunpack.c.l.b16 %v631
    %v642 = vunpack.c.l.b16 %v632
    %v643 = vpack.c.b16 %v640, %v639
    %v644 = vpack.c.b16 %v642, %v641
    %v648 = vsel %vm139, %v627, 0
    %650 = vmatpush.bf16.msra.mxu0 0
    %651 = vmatpush.bf16.msra.mxu0 0
    %652 = vmatpush.bf16.msra.mxu0 0
    %653 = vmatpush.bf16.msra.mxu0 0
    %654 = vmatpush.bf16.msra.mxu0 0
    %655 = vmatpush.bf16.msra.mxu0 0
    %656 = vmatpush.bf16.msra.mxu0 %v644
    %657 = vmatpush.bf16.msra.mxu0 %v643
    %658 = vmatmul.bf16.gmra.mxu0 %v648
    %v659 = vpop.f32.mrf.mxu0
    %v660 = vadd.f32 %v634, %v659
    %v661 = vpop.f32.mrf.mxu0
    %v662 = vadd.f32 %v634, %v661
    %663 = vdwg.mxu0
    %v664 = vmax.f32 %v660, 0.0
    %v665 = vmax.f32 %v662, 0.0
    %v666 = vpack.c.bf16 %v665, %v664
    %s667 = scalar_lea.vmem [#allocation2], 256
    %v668 = vld [vmem:[%s667] sm:$0xf]
    %v669 = vld [vmem:[%s667 + $0x4] sm:$0xf]
    %v670 = vld [vmem:[%s667 + $0x8] sm:$0xf]
    %v671 = vld [vmem:[%s667 + $0xc] sm:$0xf]
    %v672 = vld [vmem:[%s667 + $0x10] sm:$0xf]
    %v673 = vld [vmem:[%s667 + $0x14] sm:$0xf]
    %v674 = vld [vmem:[%s667 + $0x18] sm:$0xf]
    %v675 = vld [vmem:[%s667 + $0x1c] sm:$0xf]
    %v684 = vunpack.c.l.b16 %v668
    %v685 = vunpack.c.l.b16 %v669
    %v686 = vunpack.c.l.b16 %v670
    %v687 = vunpack.c.l.b16 %v671
    %v688 = vunpack.c.l.b16 %v672
    %v689 = vunpack.c.l.b16 %v673
    %v690 = vunpack.c.l.b16 %v674
    %v691 = vunpack.c.l.b16 %v675
    %v692 = vpack.c.b16 %v685, %v684
    %v693 = vpack.c.b16 %v687, %v686
    %v694 = vpack.c.b16 %v689, %v688
    %v695 = vpack.c.b16 %v691, %v690
    %vm700 = vcmask 523264
    %v702 = vsel %vm700, %v666, 0
    %704 = vmatpush.bf16.msra.mxu0 0
    %705 = vmatpush.bf16.msra.mxu0 0
    %706 = vmatpush.bf16.msra.mxu0 0
    %707 = vmatpush.bf16.msra.mxu0 0
    %708 = vmatpush.bf16.msra.mxu0 %v695
    %709 = vmatpush.bf16.msra.mxu0 %v694
    %710 = vmatpush.bf16.msra.mxu0 %v693
    %711 = vmatpush.bf16.msra.mxu0 %v692
    %712 = vmatmul.bf16.gmra.mxu0 %v702
    %v713 = vpop.f32.mrf.mxu0
    %v714 = vadd.f32 0.0, %v713
    %v715 = vpop.f32.mrf.mxu0
    %v716 = vadd.f32 0.0, %v715
    %717 = vdwg.mxu0
    %v718 = vadd.f32 %v569, %v714
    %v719 = vadd.f32 %v570, %v716
    %v720 = vld [vmem:[%s4 + $0x3] sm:$0x1]
    %v721 = vperm.slane %v720, 0
    %v722 = vadd.f32 %v718, %v721
    %v723 = vadd.f32 %v719, %v721
    %v724 = vld [vmem:[%s4 + $0xc] sm:$0x1]
    %v725 = vld [vmem:[%s4 + $0xd] sm:$0x1]
    %v726 = vsel %vm139, %v722, 0.0
    %727 = vadd.xlane.f32.xlu0 %v726
    %v728 = vpop.xlane.xlu0 %727
    %v729 = vsel %vm139, %v723, 0.0
    %730 = vadd.xlane.f32.xlu0 %v729
    %v731 = vpop.xlane.xlu0 %730
    %v732 = vmul.f32 %v722, %v722
    %v733 = vmul.f32 %v723, %v723
    %v734 = vsel %vm139, %v732, 0.0
    %735 = vadd.xlane.f32.xlu0 %v734
    %v736 = vpop.xlane.xlu0 %735
    %v737 = vsel %vm139, %v733, 0.0
    %738 = vadd.xlane.f32.xlu0 %v737
    %v739 = vpop.xlane.xlu0 %738
    %v740 = vmul.f32 %v728, 0.03125
    %v741 = vmul.f32 %v731, 0.03125
    %v742 = vmul.f32 %v736, 0.03125
    %v743 = vmul.f32 %v739, 0.03125
    %v744 = vmul.f32 %v740, %v740
    %v745 = vmul.f32 %v741, %v741
    %v746 = vsub.f32 %v742, %v744
    %v747 = vsub.f32 %v743, %v745
    %v748 = vsub.f32 %v722, %v740
    %v749 = vsub.f32 %v723, %v741
    %v750 = vadd.f32 %v746, 1e-05
    %v751 = vadd.f32 %v747, 1e-05
    %v752 = vrsqrt.pop %v750
    %v753 = vmul.f32 %v752, %v750
    %v754 = vmul.f32 %v753, %v752
    %v755 = vmul.f32 0.5, %v754
    %v756 = vsub.f32 1.5, %v755
    %v757 = vmul.f32 %v752, %v756
    %vm758 = vweird.f32 %v750
    %vm759 = vweird.f32 %v752
    %vm760 = vmor %vm758, %vm759
    %v761 = vsel %vm760, %v752, %v757
    %v762 = vrsqrt.pop %v751
    %v763 = vmul.f32 %v762, %v751
    %v764 = vmul.f32 %v763, %v762
    %v765 = vmul.f32 0.5, %v764
    %v766 = vsub.f32 1.5, %v765
    %v767 = vmul.f32 %v762, %v766
    %vm768 = vweird.f32 %v751
    %vm769 = vweird.f32 %v762
    %vm770 = vmor %vm768, %vm769
    %v771 = vsel %vm770, %v762, %v767
    %v772 = vmul.f32 %v748, %v761
    %v773 = vmul.f32 %v749, %v771
    %v774 = vperm.slane %v724, 0
    %v775 = vmul.f32 %v772, %v774
    %v776 = vmul.f32 %v773, %v774
    %v777 = vperm.slane %v725, 0
    %v778 = vadd.f32 %v775, %v777
    %v779 = vadd.f32 %v776, %v777
    %v780 = vpack.c.bf16 %v779, %v778
    %s781 = scalar_lea.vmem [#allocation2], 320
    %v782 = vld [vmem:[%s781] sm:$0xf]
    %v783 = vld [vmem:[%s781 + $0x4] sm:$0xf]
    %v784 = vld [vmem:[%s781 + $0x8] sm:$0xf]
    %v785 = vld [vmem:[%s781 + $0xc] sm:$0xf]
    %v786 = vld [vmem:[%s4 + $0x8] sm:$0x1]
    %v787 = vperm.slane %v786, 0
    %v792 = vunpack.c.l.b16 %v782
    %v793 = vunpack.c.l.b16 %v783
    %v794 = vunpack.c.l.b16 %v784
    %v795 = vunpack.c.l.b16 %v785
    %v796 = vpack.c.b16 %v793, %v792
    %v797 = vpack.c.b16 %v795, %v794
    %v801 = vsel %vm139, %v780, 0
    %803 = vmatpush.bf16.msra.mxu0 0
    %804 = vmatpush.bf16.msra.mxu0 0
    %805 = vmatpush.bf16.msra.mxu0 0
    %806 = vmatpush.bf16.msra.mxu0 0
    %807 = vmatpush.bf16.msra.mxu0 0
    %808 = vmatpush.bf16.msra.mxu0 0
    %809 = vmatpush.bf16.msra.mxu0 %v797
    %810 = vmatpush.bf16.msra.mxu0 %v796
    %811 = vmatmul.bf16.gmra.mxu0 %v801
    %v812 = vpop.f32.mrf.mxu0
    %v813 = vadd.f32 %v787, %v812
    %v814 = vpop.f32.mrf.mxu0
    %v815 = vadd.f32 %v787, %v814
    %816 = vdwg.mxu0
    %v817 = vpack.c.bf16 %v815, %v813
    %819 = vrot.lane.b32.xlu0 %v817, 96
    %v820 = vpop.permute.xlu0 %819
    %v822 = vsel %vm235, %v817, 0
    %v825 = vsel %vm235, %v820, 0
    %827 = vmatpush.bf16.xpose.msra.mxu0 0
    %828 = vmatpush.bf16.xpose.msra.mxu0 0
    %829 = vmatpush.bf16.xpose.msra.mxu0 0
    %830 = vmatpush.bf16.xpose.msra.mxu0 0
    %831 = vmatpush.bf16.xpose.msra.mxu0 0
    %832 = vmatpush.bf16.xpose.msra.mxu0 0
    %833 = vmatpush.bf16.xpose.msra.mxu0 0
    %834 = vmatpush.bf16.xpose.msra.mxu0 %v825
    %835 = vmatmul.bf16.gmra.mxu0 %v822
    %v836 = vpop.f32.mrf.mxu0
    %v837 = vadd.f32 %v135, %v836
    %v838 = vpop.f32.mrf.mxu0
    %v839 = vadd.f32 %v136, %v838
    %840 = vdwg.mxu0
    %v841 = vsel %vm256, %v837, -inf
    %842 = vmax.xlane.f32.xlu0 %v841
    %v843 = vpop.xlane.xlu0 %842
    %v844 = vsel %vm256, %v839, -inf
    %845 = vmax.xlane.f32.xlu0 %v844
    %v846 = vpop.xlane.xlu0 %845
    %v847 = vsub.f32 %v837, %v843
    %v848 = vsub.f32 %v839, %v846
    %v849 = vmul.f32 %v847, 1.442695
    %v850 = vpow.pop %v849
    %v851 = vmul.f32 %v848, 1.442695
    %v852 = vpow.pop %v851
    %v853 = vsel %vm256, %v850, 0.0
    %854 = vadd.xlane.f32.xlu0 %v853
    %v855 = vpop.xlane.xlu0 %854
    %v856 = vsel %vm256, %v852, 0.0
    %857 = vadd.xlane.f32.xlu0 %v856
    %v858 = vpop.xlane.xlu0 %857
    %v859 = vrcp.pop %v855
    %v860 = vrcp.pop %v858
    %v861 = vmul.f32 %v850, %v859
    %v862 = vmul.f32 %v852, %v860
    %v863 = vpack.c.bf16 %v862, %v861
    %864 = vrot.lane.b32.xlu0 %v817, 64
    %v865 = vpop.permute.xlu0 %864
    %v868 = vsel %vm256, %v863, 0
    %870 = vmatpush.bf16.msra.mxu0 0
    %871 = vmatpush.bf16.msra.mxu0 0
    %872 = vmatpush.bf16.msra.mxu0 0
    %873 = vmatpush.bf16.msra.mxu0 0
    %874 = vmatpush.bf16.msra.mxu0 0
    %875 = vmatpush.bf16.msra.mxu0 0
    %876 = vmatpush.bf16.msra.mxu0 0
    %877 = vmatpush.bf16.msra.mxu0 %v865
    %878 = vmatmul.bf16.gmra.mxu0 %v868
    %v879 = vpop.f32.mrf.mxu0
    %v880 = vadd.f32 0.0, %v879
    %v881 = vpop.f32.mrf.mxu0
    %v882 = vadd.f32 0.0, %v881
    %883 = vdwg.mxu0
    %884 = vrot.lane.b32.xlu0 %v817, 120
    %v885 = vpop.permute.xlu0 %884
    %886 = vrot.lane.b32.xlu0 %v817, 88
    %v887 = vpop.permute.xlu0 %886
    %v889 = vsel %vm235, %v885, 0
    %v892 = vsel %vm235, %v887, 0
    %894 = vmatpush.bf16.xpose.msra.mxu0 0
    %895 = vmatpush.bf16.xpose.msra.mxu0 0
    %896 = vmatpush.bf16.xpose.msra.mxu0 0
    %897 = vmatpush.bf16.xpose.msra.mxu0 0
    %898 = vmatpush.bf16.xpose.msra.mxu0 0
    %899 = vmatpush.bf16.xpose.msra.mxu0 0
    %900 = vmatpush.bf16.xpose.msra.mxu0 0
    %901 = vmatpush.bf16.xpose.msra.mxu0 %v892
    %902 = vmatmul.bf16.gmra.mxu0 %v889
    %v903 = vpop.f32.mrf.mxu0
    %v904 = vadd.f32 %v135, %v903
    %v905 = vpop.f32.mrf.mxu0
    %v906 = vadd.f32 %v136, %v905
    %907 = vdwg.mxu0
    %v908 = vsel %vm256, %v904, -inf
    %909 = vmax.xlane.f32.xlu0 %v908
    %v910 = vpop.xlane.xlu0 %909
    %v911 = vsel %vm256, %v906, -inf
    %912 = vmax.xlane.f32.xlu0 %v911
    %v913 = vpop.xlane.xlu0 %912
    %v914 = vsub.f32 %v904, %v910
    %v915 = vsub.f32 %v906, %v913
    %v916 = vmul.f32 %v914, 1.442695
    %v917 = vpow.pop %v916
    %v918 = vmul.f32 %v915, 1.442695
    %v919 = vpow.pop %v918
    %v920 = vsel %vm256, %v917, 0.0
    %921 = vadd.xlane.f32.xlu0 %v920
    %v922 = vpop.xlane.xlu0 %921
    %v923 = vsel %vm256, %v919, 0.0
    %924 = vadd.xlane.f32.xlu0 %v923
    %v925 = vpop.xlane.xlu0 %924
    %v926 = vrcp.pop %v922
    %v927 = vrcp.pop %v925
    %v928 = vmul.f32 %v917, %v926
    %v929 = vmul.f32 %v919, %v927
    %v930 = vpack.c.bf16 %v929, %v928
    %931 = vrot.lane.b32.xlu0 %v817, 56
    %v932 = vpop.permute.xlu0 %931
    %v935 = vsel %vm256, %v930, 0
    %937 = vmatpush.bf16.msra.mxu0 0
    %938 = vmatpush.bf16.msra.mxu0 0
    %939 = vmatpush.bf16.msra.mxu0 0
    %940 = vmatpush.bf16.msra.mxu0 0
    %941 = vmatpush.bf16.msra.mxu0 0
    %942 = vmatpush.bf16.msra.mxu0 0
    %943 = vmatpush.bf16.msra.mxu0 0
    %944 = vmatpush.bf16.msra.mxu0 %v932
    %945 = vmatmul.bf16.gmra.mxu0 %v935
    %v946 = vpop.f32.mrf.mxu0
    %v947 = vadd.f32 0.0, %v946
    %v948 = vpop.f32.mrf.mxu0
    %v949 = vadd.f32 0.0, %v948
    %950 = vdwg.mxu0
    %951 = vrot.lane.b32.xlu0 %v817, 112
    %v952 = vpop.permute.xlu0 %951
    %953 = vrot.lane.b32.xlu0 %v817, 80
    %v954 = vpop.permute.xlu0 %953
    %v956 = vsel %vm235, %v952, 0
    %v959 = vsel %vm235, %v954, 0
    %961 = vmatpush.bf16.xpose.msra.mxu0 0
    %962 = vmatpush.bf16.xpose.msra.mxu0 0
    %963 = vmatpush.bf16.xpose.msra.mxu0 0
    %964 = vmatpush.bf16.xpose.msra.mxu0 0
    %965 = vmatpush.bf16.xpose.msra.mxu0 0
    %966 = vmatpush.bf16.xpose.msra.mxu0 0
    %967 = vmatpush.bf16.xpose.msra.mxu0 0
    %968 = vmatpush.bf16.xpose.msra.mxu0 %v959
    %969 = vmatmul.bf16.gmra.mxu0 %v956
    %v970 = vpop.f32.mrf.mxu0
    %v971 = vadd.f32 %v135, %v970
    %v972 = vpop.f32.mrf.mxu0
    %v973 = vadd.f32 %v136, %v972
    %974 = vdwg.mxu0
    %v975 = vsel %vm256, %v971, -inf
    %976 = vmax.xlane.f32.xlu0 %v975
    %v977 = vpop.xlane.xlu0 %976
    %v978 = vsel %vm256, %v973, -inf
    %979 = vmax.xlane.f32.xlu0 %v978
    %v980 = vpop.xlane.xlu0 %979
    %v981 = vsub.f32 %v971, %v977
    %v982 = vsub.f32 %v973, %v980
    %v983 = vmul.f32 %v981, 1.442695
    %v984 = vpow.pop %v983
    %v985 = vmul.f32 %v982, 1.442695
    %v986 = vpow.pop %v985
    %v987 = vsel %vm256, %v984, 0.0
    %988 = vadd.xlane.f32.xlu0 %v987
    %v989 = vpop.xlane.xlu0 %988
    %v990 = vsel %vm256, %v986, 0.0
    %991 = vadd.xlane.f32.xlu0 %v990
    %v992 = vpop.xlane.xlu0 %991
    %v993 = vrcp.pop %v989
    %v994 = vrcp.pop %v992
    %v995 = vmul.f32 %v984, %v993
    %v996 = vmul.f32 %v986, %v994
    %v997 = vpack.c.bf16 %v996, %v995
    %998 = vrot.lane.b32.xlu0 %v817, 48
    %v999 = vpop.permute.xlu0 %998
    %v1002 = vsel %vm256, %v997, 0
    %1004 = vmatpush.bf16.msra.mxu0 0
    %1005 = vmatpush.bf16.msra.mxu0 0
    %1006 = vmatpush.bf16.msra.mxu0 0
    %1007 = vmatpush.bf16.msra.mxu0 0
    %1008 = vmatpush.bf16.msra.mxu0 0
    %1009 = vmatpush.bf16.msra.mxu0 0
    %1010 = vmatpush.bf16.msra.mxu0 0
    %1011 = vmatpush.bf16.msra.mxu0 %v999
    %1012 = vmatmul.bf16.gmra.mxu0 %v1002
    %v1013 = vpop.f32.mrf.mxu0
    %v1014 = vadd.f32 0.0, %v1013
    %v1015 = vpop.f32.mrf.mxu0
    %v1016 = vadd.f32 0.0, %v1015
    %1017 = vdwg.mxu0
    %1018 = vrot.lane.b32.xlu0 %v817, 104
    %v1019 = vpop.permute.xlu0 %1018
    %1020 = vrot.lane.b32.xlu0 %v817, 72
    %v1021 = vpop.permute.xlu0 %1020
    %v1023 = vsel %vm235, %v1019, 0
    %v1026 = vsel %vm235, %v1021, 0
    %1028 = vmatpush.bf16.xpose.msra.mxu0 0
    %1029 = vmatpush.bf16.xpose.msra.mxu0 0
    %1030 = vmatpush.bf16.xpose.msra.mxu0 0
    %1031 = vmatpush.bf16.xpose.msra.mxu0 0
    %1032 = vmatpush.bf16.xpose.msra.mxu0 0
    %1033 = vmatpush.bf16.xpose.msra.mxu0 0
    %1034 = vmatpush.bf16.xpose.msra.mxu0 0
    %1035 = vmatpush.bf16.xpose.msra.mxu0 %v1026
    %1036 = vmatmul.bf16.gmra.mxu0 %v1023
    %v1037 = vpop.f32.mrf.mxu0
    %v1038 = vadd.f32 %v135, %v1037
    %v1039 = vpop.f32.mrf.mxu0
    %v1040 = vadd.f32 %v136, %v1039
    %1041 = vdwg.mxu0
    %v1042 = vsel %vm256, %v1038, -inf
    %1043 = vmax.xlane.f32.xlu0 %v1042
    %v1044 = vpop.xlane.xlu0 %1043
    %v1045 = vsel %vm256, %v1040, -inf
    %1046 = vmax.xlane.f32.xlu0 %v1045
    %v1047 = vpop.xlane.xlu0 %1046
    %v1048 = vsub.f32 %v1038, %v1044
    %v1049 = vsub.f32 %v1040, %v1047
    %v1050 = vmul.f32 %v1048, 1.442695
    %v1051 = vpow.pop %v1050
    %v1052 = vmul.f32 %v1049, 1.442695
    %v1053 = vpow.pop %v1052
    %v1054 = vsel %vm256, %v1051, 0.0
    %1055 = vadd.xlane.f32.xlu0 %v1054
    %v1056 = vpop.xlane.xlu0 %1055
    %v1057 = vsel %vm256, %v1053, 0.0
    %1058 = vadd.xlane.f32.xlu0 %v1057
    %v1059 = vpop.xlane.xlu0 %1058
    %v1060 = vrcp.pop %v1056
    %v1061 = vrcp.pop %v1059
    %v1062 = vmul.f32 %v1051, %v1060
    %v1063 = vmul.f32 %v1053, %v1061
    %v1064 = vpack.c.bf16 %v1063, %v1062
    %1065 = vrot.lane.b32.xlu0 %v817, 40
    %v1066 = vpop.permute.xlu0 %1065
    %v1069 = vsel %vm256, %v1064, 0
    %1071 = vmatpush.bf16.msra.mxu0 0
    %1072 = vmatpush.bf16.msra.mxu0 0
    %1073 = vmatpush.bf16.msra.mxu0 0
    %1074 = vmatpush.bf16.msra.mxu0 0
    %1075 = vmatpush.bf16.msra.mxu0 0
    %1076 = vmatpush.bf16.msra.mxu0 0
    %1077 = vmatpush.bf16.msra.mxu0 0
    %1078 = vmatpush.bf16.msra.mxu0 %v1066
    %1079 = vmatmul.bf16.gmra.mxu0 %v1069
    %v1080 = vpop.f32.mrf.mxu0
    %v1081 = vadd.f32 0.0, %v1080
    %v1082 = vpop.f32.mrf.mxu0
    %v1083 = vadd.f32 0.0, %v1082
    %1084 = vdwg.mxu0
    %1087 = vrot.lane.b32.xlu0 %v947, 8
    %v1088 = vpop.permute.xlu0 %1087
    %1089 = vrot.lane.b32.xlu0 %v949, 8
    %v1090 = vpop.permute.xlu0 %1089
    %1095 = vrot.lane.b32.xlu0 %v1014, 16
    %v1096 = vpop.permute.xlu0 %1095
    %1097 = vrot.lane.b32.xlu0 %v1016, 16
    %v1098 = vpop.permute.xlu0 %1097
    %1103 = vrot.lane.b32.xlu0 %v1081, 24
    %v1104 = vpop.permute.xlu0 %1103
    %1105 = vrot.lane.b32.xlu0 %v1083, 24
    %v1106 = vpop.permute.xlu0 %1105
    %v1109 = vsel %vm235, %v880, %v1088
    %v1110 = vsel %vm235, %v882, %v1090
    %v1111 = vsel %vm256, %v1109, %v1096
    %v1112 = vsel %vm256, %v1110, %v1098
    %v1113 = vsel %vm529, %v1111, %v1104
    %v1114 = vsel %vm529, %v1112, %v1106
    %v1115 = vpack.c.bf16 %v1114, %v1113
    %s1116 = scalar_lea.vmem [#allocation2], 384
    %v1117 = vld [vmem:[%s1116] sm:$0xf]
    %v1118 = vld [vmem:[%s1116 + $0x4] sm:$0xf]
    %v1119 = vld [vmem:[%s1116 + $0x8] sm:$0xf]
    %v1120 = vld [vmem:[%s1116 + $0xc] sm:$0xf]
    %v1121 = vld [vmem:[%s4 + $0x9] sm:$0x1]
    %v1122 = vperm.slane %v1121, 0
    %v1127 = vunpack.c.l.b16 %v1117
    %v1128 = vunpack.c.l.b16 %v1118
    %v1129 = vunpack.c.l.b16 %v1119
    %v1130 = vunpack.c.l.b16 %v1120
    %v1131 = vpack.c.b16 %v1128, %v1127
    %v1132 = vpack.c.b16 %v1130, %v1129
    %v1136 = vsel %vm139, %v1115, 0
    %1138 = vmatpush.bf16.msra.mxu0 0
    %1139 = vmatpush.bf16.msra.mxu0 0
    %1140 = vmatpush.bf16.msra.mxu0 0
    %1141 = vmatpush.bf16.msra.mxu0 0
    %1142 = vmatpush.bf16.msra.mxu0 0
    %1143 = vmatpush.bf16.msra.mxu0 0
    %1144 = vmatpush.bf16.msra.mxu0 %v1132
    %1145 = vmatpush.bf16.msra.mxu0 %v1131
    %1146 = vmatmul.bf16.gmra.mxu0 %v1136
    %v1147 = vpop.f32.mrf.mxu0
    %v1148 = vadd.f32 %v1122, %v1147
    %v1149 = vpop.f32.mrf.mxu0
    %v1150 = vadd.f32 %v1122, %v1149
    %1151 = vdwg.mxu0
    %v1152 = vadd.f32 %v722, %v1148
    %v1153 = vadd.f32 %v723, %v1150
    %v1154 = vld [vmem:[%s4 + $0xe] sm:$0x1]
    %v1155 = vld [vmem:[%s4 + $0xf] sm:$0x1]
    %v1156 = vsel %vm139, %v1152, 0.0
    %1157 = vadd.xlane.f32.xlu0 %v1156
    %v1158 = vpop.xlane.xlu0 %1157
    %v1159 = vsel %vm139, %v1153, 0.0
    %1160 = vadd.xlane.f32.xlu0 %v1159
    %v1161 = vpop.xlane.xlu0 %1160
    %v1162 = vmul.f32 %v1152, %v1152
    %v1163 = vmul.f32 %v1153, %v1153
    %v1164 = vsel %vm139, %v1162, 0.0
    %1165 = vadd.xlane.f32.xlu0 %v1164
    %v1166 = vpop.xlane.xlu0 %1165
    %v1167 = vsel %vm139, %v1163, 0.0
    %1168 = vadd.xlane.f32.xlu0 %v1167
    %v1169 = vpop.xlane.xlu0 %1168
    %v1170 = vmul.f32 %v1158, 0.03125
    %v1171 = vmul.f32 %v1161, 0.03125
    %v1172 = vmul.f32 %v1166, 0.03125
    %v1173 = vmul.f32 %v1169, 0.03125
    %v1174 = vmul.f32 %v1170, %v1170
    %v1175 = vmul.f32 %v1171, %v1171
    %v1176 = vsub.f32 %v1172, %v1174
    %v1177 = vsub.f32 %v1173, %v1175
    %v1178 = vsub.f32 %v1152, %v1170
    %v1179 = vsub.f32 %v1153, %v1171
    %v1180 = vadd.f32 %v1176, 1e-05
    %v1181 = vadd.f32 %v1177, 1e-05
    %v1182 = vrsqrt.pop %v1180
    %v1183 = vmul.f32 %v1182, %v1180
    %v1184 = vmul.f32 %v1183, %v1182
    %v1185 = vmul.f32 0.5, %v1184
    %v1186 = vsub.f32 1.5, %v1185
    %v1187 = vmul.f32 %v1182, %v1186
    %vm1188 = vweird.f32 %v1180
    %vm1189 = vweird.f32 %v1182
    %vm1190 = vmor %vm1188, %vm1189
    %v1191 = vsel %vm1190, %v1182, %v1187
    %v1192 = vrsqrt.pop %v1181
    %v1193 = vmul.f32 %v1192, %v1181
    %v1194 = vmul.f32 %v1193, %v1192
    %v1195 = vmul.f32 0.5, %v1194
    %v1196 = vsub.f32 1.5, %v1195
    %v1197 = vmul.f32 %v1192, %v1196
    %vm1198 = vweird.f32 %v1181
    %vm1199 = vweird.f32 %v1192
    %vm1200 = vmor %vm1198, %vm1199
    %v1201 = vsel %vm1200, %v1192, %v1197
    %v1202 = vmul.f32 %v1178, %v1191
    %v1203 = vmul.f32 %v1179, %v1201
    %v1204 = vperm.slane %v1154, 0
    %v1205 = vmul.f32 %v1202, %v1204
    %v1206 = vmul.f32 %v1203, %v1204
    %v1207 = vperm.slane %v1155, 0
    %v1208 = vadd.f32 %v1205, %v1207
    %v1209 = vadd.f32 %v1206, %v1207
    %v1210 = vpack.c.bf16 %v1209, %v1208
    %s1211 = scalar_lea.vmem [#allocation2], 448
    %v1212 = vld [vmem:[%s1211] sm:$0xf]
    %v1213 = vld [vmem:[%s1211 + $0x4] sm:$0xf]
    %v1214 = vld [vmem:[%s1211 + $0x8] sm:$0xf]
    %v1215 = vld [vmem:[%s1211 + $0xc] sm:$0xf]
    %v1216 = vld [vmem:[%s4 + $0xa] sm:$0x1]
    %v1217 = vperm.slane %v1216, 0
    %v1222 = vunpack.c.l.b16 %v1212
    %v1223 = vunpack.c.l.b16 %v1213
    %v1224 = vunpack.c.l.b16 %v1214
    %v1225 = vunpack.c.l.b16 %v1215
    %v1226 = vpack.c.b16 %v1223, %v1222
    %v1227 = vpack.c.b16 %v1225, %v1224
    %v1231 = vsel %vm139, %v1210, 0
    %1233 = vmatpush.bf16.msra.mxu0 0
    %1234 = vmatpush.bf16.msra.mxu0 0
    %1235 = vmatpush.bf16.msra.mxu0 0
    %1236 = vmatpush.bf16.msra.mxu0 0
    %1237 = vmatpush.bf16.msra.mxu0 0
    %1238 = vmatpush.bf16.msra.mxu0 0
    %1239 = vmatpush.bf16.msra.mxu0 %v1227
    %1240 = vmatpush.bf16.msra.mxu0 %v1226
    %1241 = vmatmul.bf16.gmra.mxu0 %v1231
    %v1242 = vpop.f32.mrf.mxu0
    %v1243 = vadd.f32 %v1217, %v1242
    %v1244 = vpop.f32.mrf.mxu0
    %v1245 = vadd.f32 %v1217, %v1244
    %1246 = vdwg.mxu0
    %v1247 = vmax.f32 %v1243, 0.0
    %v1248 = vmax.f32 %v1245, 0.0
    %v1249 = vpack.c.bf16 %v1248, %v1247
    %s1250 = scalar_lea.vmem [#allocation2], 512
    %v1251 = vld [vmem:[%s1250] sm:$0xf]
    %v1252 = vld [vmem:[%s1250 + $0x4] sm:$0xf]
    %v1253 = vld [vmem:[%s1250 + $0x8] sm:$0xf]
    %v1254 = vld [vmem:[%s1250 + $0xc] sm:$0xf]
    %v1255 = vld [vmem:[%s1250 + $0x10] sm:$0xf]
    %v1256 = vld [vmem:[%s1250 + $0x14] sm:$0xf]
    %v1257 = vld [vmem:[%s1250 + $0x18] sm:$0xf]
    %v1258 = vld [vmem:[%s1250 + $0x1c] sm:$0xf]
    %v1267 = vunpack.c.l.b16 %v1251
    %v1268 = vunpack.c.l.b16 %v1252
    %v1269 = vunpack.c.l.b16 %v1253
    %v1270 = vunpack.c.l.b16 %v1254
    %v1271 = vunpack.c.l.b16 %v1255
    %v1272 = vunpack.c.l.b16 %v1256
    %v1273 = vunpack.c.l.b16 %v1257
    %v1274 = vunpack.c.l.b16 %v1258
    %v1275 = vpack.c.b16 %v1268, %v1267
    %v1276 = vpack.c.b16 %v1270, %v1269
    %v1277 = vpack.c.b16 %v1272, %v1271
    %v1278 = vpack.c.b16 %v1274, %v1273
    %v1284 = vsel %vm700, %v1249, 0
    %1286 = vmatpush.bf16.msra.mxu0 0
    %1287 = vmatpush.bf16.msra.mxu0 0
    %1288 = vmatpush.bf16.msra.mxu0 0
    %1289 = vmatpush.bf16.msra.mxu0 0
    %1290 = vmatpush.bf16.msra.mxu0 %v1278
    %1291 = vmatpush.bf16.msra.mxu0 %v1277
    %1292 = vmatpush.bf16.msra.mxu0 %v1276
    %1293 = vmatpush.bf16.msra.mxu0 %v1275
    %1294 = vmatmul.bf16.gmra.mxu0 %v1284
    %v1295 = vpop.f32.mrf.mxu0
    %v1296 = vadd.f32 0.0, %v1295
    %v1297 = vpop.f32.mrf.mxu0
    %v1298 = vadd.f32 0.0, %v1297
    %1299 = vdwg.mxu0
    %v1300 = vadd.f32 %v1152, %v1296
    %v1301 = vadd.f32 %v1153, %v1298
    %v1302 = vld [vmem:[%s4 + $0xb] sm:$0x1]
    %v1303 = vperm.slane %v1302, 0
    %v1304 = vadd.f32 %v1300, %v1303
    %v1305 = vadd.f32 %v1301, %v1303
    %v1306 = vld [vmem:[%s4 + $0x10] sm:$0x1]
    %v1307 = vld [vmem:[%s4 + $0x11] sm:$0x1]
    %v1308 = vsel %vm139, %v1304, 0.0
    %1309 = vadd.xlane.f32.xlu0 %v1308
    %v1310 = vpop.xlane.xlu0 %1309
    %v1311 = vsel %vm139, %v1305, 0.0
    %1312 = vadd.xlane.f32.xlu0 %v1311
    %v1313 = vpop.xlane.xlu0 %1312
    %v1314 = vmul.f32 %v1304, %v1304
    %v1315 = vmul.f32 %v1305, %v1305
    %v1316 = vsel %vm139, %v1314, 0.0
    %1317 = vadd.xlane.f32.xlu0 %v1316
    %v1318 = vpop.xlane.xlu0 %1317
    %v1319 = vsel %vm139, %v1315, 0.0
    %1320 = vadd.xlane.f32.xlu0 %v1319
    %v1321 = vpop.xlane.xlu0 %1320
    %v1322 = vmul.f32 %v1310, 0.03125
    %v1323 = vmul.f32 %v1313, 0.03125
    %v1324 = vmul.f32 %v1318, 0.03125
    %v1325 = vmul.f32 %v1321, 0.03125
    %v1326 = vmul.f32 %v1322, %v1322
    %v1327 = vmul.f32 %v1323, %v1323
    %v1328 = vsub.f32 %v1324, %v1326
    %v1329 = vsub.f32 %v1325, %v1327
    %v1330 = vsub.f32 %v1304, %v1322
    %v1331 = vsub.f32 %v1305, %v1323
    %v1332 = vadd.f32 %v1328, 1e-05
    %v1333 = vadd.f32 %v1329, 1e-05
    %v1334 = vrsqrt.pop %v1332
    %v1335 = vmul.f32 %v1334, %v1332
    %v1336 = vmul.f32 %v1335, %v1334
    %v1337 = vmul.f32 0.5, %v1336
    %v1338 = vsub.f32 1.5, %v1337
    %v1339 = vmul.f32 %v1334, %v1338
    %vm1340 = vweird.f32 %v1332
    %vm1341 = vweird.f32 %v1334
    %vm1342 = vmor %vm1340, %vm1341
    %v1343 = vsel %vm1342, %v1334, %v1339
    %v1344 = vrsqrt.pop %v1333
    %v1345 = vmul.f32 %v1344, %v1333
    %v1346 = vmul.f32 %v1345, %v1344
    %v1347 = vmul.f32 0.5, %v1346
    %v1348 = vsub.f32 1.5, %v1347
    %v1349 = vmul.f32 %v1344, %v1348
    %vm1350 = vweird.f32 %v1333
    %vm1351 = vweird.f32 %v1344
    %vm1352 = vmor %vm1350, %vm1351
    %v1353 = vsel %vm1352, %v1344, %v1349
    %v1354 = vmul.f32 %v1330, %v1343
    %v1355 = vmul.f32 %v1331, %v1353
    %v1356 = vperm.slane %v1306, 0
    %v1357 = vmul.f32 %v1354, %v1356
    %v1358 = vmul.f32 %v1355, %v1356
    %v1359 = vperm.slane %v1307, 0
    %v1360 = vadd.f32 %v1357, %v1359
    %v1361 = vadd.f32 %v1358, %v1359
    %v1362 = vpack.c.bf16 %v1361, %v1360
    %s1363 = scalar_lea.vmem [#allocation2], 576
    %v1364 = vld [vmem:[%s1363] sm:$0xf]
    %v1365 = vld [vmem:[%s1363 + $0x4] sm:$0xf]
    %v1366 = vld [vmem:[%s1363 + $0x8] sm:$0xf]
    %v1367 = vld [vmem:[%s1363 + $0xc] sm:$0xf]
    %v1368 = vld [vmem:[%s4 + $0x12] sm:$0x1]
    %v1369 = vperm.slane %v1368, 0
    %v1374 = vunpack.c.l.b16 %v1364
    %v1375 = vunpack.c.l.b16 %v1365
    %v1376 = vunpack.c.l.b16 %v1366
    %v1377 = vunpack.c.l.b16 %v1367
    %v1378 = vpack.c.b16 %v1375, %v1374
    %v1379 = vpack.c.b16 %v1377, %v1376
    %v1383 = vsel %vm139, %v1362, 0
    %1385 = vmatpush.bf16.msra.mxu0 0
    %1386 = vmatpush.bf16.msra.mxu0 0
    %1387 = vmatpush.bf16.msra.mxu0 0
    %1388 = vmatpush.bf16.msra.mxu0 0
    %1389 = vmatpush.bf16.msra.mxu0 0
    %1390 = vmatpush.bf16.msra.mxu0 0
    %1391 = vmatpush.bf16.msra.mxu0 %v1379
    %1392 = vmatpush.bf16.msra.mxu0 %v1378
    %1393 = vmatmul.bf16.gmra.mxu0 %v1383
    %v1394 = vpop.f32.mrf.mxu0
    %v1395 = vadd.f32 %v1369, %v1394
    %v1396 = vpop.f32.mrf.mxu0
    %v1397 = vadd.f32 %v1369, %v1396
    %1398 = vdwg.mxu0
    %1399 = vmax.xlane.f32.xlu0 %v1395
    %v1400 = vpop.xlane.xlu0 %1399
    %1401 = vmax.xlane.f32.xlu0 %v1397
    %v1402 = vpop.xlane.xlu0 %1401
    %v1403 = vsub.f32 %v1395, %v1400
    %v1404 = vsub.f32 %v1397, %v1402
    %v1405 = vmul.f32 %v1403, 1.442695
    %v1406 = vpow.pop %v1405
    %v1407 = vmul.f32 %v1404, 1.442695
    %v1408 = vpow.pop %v1407
    %1409 = vadd.xlane.f32.xlu0 %v1406
    %v1410 = vpop.xlane.xlu0 %1409
    %1411 = vadd.xlane.f32.xlu0 %v1408
    %v1412 = vpop.xlane.xlu0 %1411
    %v1413 = vlog2.pop %v1410
    %v1414 = vmul.f32 %v1413, 0.6931472
    %v1415 = vlog2.pop %v1412
    %v1416 = vmul.f32 %v1415, 0.6931472
    %v1417 = vsub.f32 %v1403, %v1414
    %v1418 = vsub.f32 %v1404, %v1416
    %1419 = vst [vmem:[#allocation5] sm:$0xff] %v1417
    %1420 = vst [vmem:[#allocation5 + $0x8] sm:$0xff] %v1418
    // Predicated region
    $region26: #{full_transformer_forward.1} parent=1 // pred_check
      _
    $region27: #{full_transformer_forward.1} parent=1 // pred_check_branch
      %1422 = sbr.rel (0) target = $region29
    $region28: #{full_transformer_forward.1} parent=1 // pred_region
      %1424 = vsyncadd [#allocation4], 0
      %s1425 = sshll.u32 [#allocation5], 4
      %s1426 = int_to_ptr.vmem [resolvable:$true] %s1425
      %s1427 = sshll.u32 %s5, 4
      %s1428 = int_to_ptr.hbm [resolvable:$true] %s1427
      %1433 = dma.vmem_to_hbm [thread:$0]  %s1426, 256, %s1428, [#allocation4], 128, 128, 8
    $region29: #{full_transformer_forward.1} parent=1 // pred_fallthru
      _
    // Predicated region
    $region30: #{full_transformer_forward.1} parent=1 // pred_check
      _
    $region31: #{full_transformer_forward.1} parent=1 // pred_check_branch
      %1435 = sbr.rel (0) target = $region33
    $region32: #{full_transformer_forward.1} parent=1 // pred_region
      %1437 = dma.done [#allocation4], 256
    $region33: #{full_transformer_forward.1} parent=1 // pred_fallthru
      _
    %1438 = vsyncpa [#allocation3], 1
    %1439 = vsyncpa [#allocation4], 1

</llo_original>
